<compile_context>
chip_gen: v7x
topology: tpu7x:2x2x1
jax: 0.10.0
libtpu: 0.0.40
codegen_flags: <defaults>
</compile_context>

<pallas_src>
import math
import itertools

import jax
import jax.numpy as jnp
from jax.experimental import pallas as pl
from jax.experimental.pallas import tpu as pltpu


def _round_up(x, m):
    return -(-x // m) * m


def _vmem_capacity_bytes():
    """Generation-aware VMEM capacity; falls back to the smallest (v7x, 64 MiB/TC)."""
    try:
        info = pltpu.get_tpu_info()
        cap = int(getattr(info, "vmem_capacity_bytes", 0))
        if cap > 0:
            return cap
    except Exception:
        pass
    return 64 * 1024 * 1024


# ----------------------------- Pallas kernel ---------------------------------

def _make_varconv_kernel(koffs, c_in, c_out, n_halo):
    """Per-tile locally-connected contraction (one tile = s_blk padded-pitch lanes).

    x_refs[j] : (B, C_in, s_blk) f32   input tile shifted by j*s_blk lanes (halo)
    w_ref     : (K*C_out, s_blk) bf16  flat per-location weights
    bt_ref    : (C_out, s_blk)   f32   bias[s] * sum_k w[k, c, s]  (accumulator init)
    o_ref     : (B, C_out, s_blk) f32
    """
    n_k = len(koffs)

    def kernel(*refs):
        x_refs = refs[:n_halo]
        w_ref, bt_ref, o_ref = refs[n_halo], refs[n_halo + 1], refs[n_halo + 2]
        s_blk = o_ref.shape[-1]

        # Accumulator initialised with the folded bias term (broadcast over batch).
        acc = jnp.broadcast_to(bt_ref[...][None, :, :], o_ref.shape).astype(jnp.float32)

        for ci in range(c_in):
            # Lane window covering every kernel offset for this tile: static concat of
            # the halo blocks -> all shifted views are static lane slices (fused unfold).
            if n_halo > 1:
                row = jnp.concatenate([r[:, ci, :] for r in x_refs], axis=-1)
            else:
                row = x_refs[0][:, ci, :]
            for j, koff in enumerate(koffs):
                xk = row[:, koff:koff + s_blk]                      # (B, s_blk), static shift
                r0 = (ci * n_k + j) * c_out
                wk = w_ref[r0:r0 + c_out, :].astype(jnp.float32)    # (C_out, s_blk)
                acc = acc + xk[:, None, :] * wk[None, :, :]         # VPU MAC, f32 accum
        o_ref[...] = acc.astype(o_ref.dtype)

    return kernel


def varconv_pallas(x_flat, w_flat, bt_flat, *, koffs, c_in, c_out, s_blk, n_halo,
                   vmem_limit_bytes, cost_estimate):
    """x_flat (B, C_in, S_pad + (n_halo-1)*s_blk) f32, w_flat (K*C_out, S_pad) bf16,
    bt_flat (C_out, S_pad) f32  ->  (B, C_out, S_pad) f32."""
    B = x_flat.shape[0]
    kc, s_pad = w_flat.shape
    assert s_pad % s_blk == 0 and s_blk % 128 == 0
    assert x_flat.shape[-1] == s_pad + (n_halo - 1) * s_blk

    kern = _make_varconv_kernel(tuple(koffs), c_in, c_out, n_halo)
    # Fused unfold: the SAME input array is fed n_halo times with lane-shifted index
    # maps, giving the kernel a halo window instead of a materialized patch tensor.
    x_specs = [pl.BlockSpec((B, c_in, s_blk), (lambda i, j=j: (0, 0, i + j)))
               for j in range(n_halo)]
    return pl.pallas_call(
        kern,
        out_shape=jax.ShapeDtypeStruct((B, c_out, s_pad), jnp.float32),
        grid=(s_pad // s_blk,),
        in_specs=x_specs + [
            pl.BlockSpec((kc, s_blk), lambda i: (0, i)),       # bf16 weight stream
            pl.BlockSpec((c_out, s_blk), lambda i: (0, i)),    # folded bias term
        ],
        out_specs=pl.BlockSpec((B, c_out, s_blk), lambda i: (0, 0, i)),
        compiler_params=pltpu.CompilerParams(
            dimension_semantics=("parallel",),                 # S tiles -> 2 TCs on v7x
            vmem_limit_bytes=int(vmem_limit_bytes)),
        cost_estimate=cost_estimate,
    )(*([x_flat] * n_halo), w_flat, bt_flat)


# ------------------------------ JAX glue --------------------------------------

def unfold_nd(x, kernel_size, padding_pairs, stride):
    """torch.nn.Unfold-equivalent (reference only). x: (B, C, *spatial) ->
    (B, C*prod(k), L) with channel-slowest / kernel-offset-fastest K ordering."""
    ndims = len(kernel_size)
    B, C = x.shape[0], x.shape[1]
    xp = jnp.pad(x, ((0, 0), (0, 0)) + tuple(padding_pairs))
    padded_spatial = xp.shape[2:]
    out_spatial = tuple(
        (padded_spatial[d] - kernel_size[d]) // stride + 1 for d in range(ndims))
    patches = []
    for offs in itertools.product(*[range(k) for k in kernel_size]):
        idx = (slice(None), slice(None)) + tuple(
            slice(offs[d], offs[d] + stride * out_spatial[d], stride) for d in range(ndims))
        patches.append(xp[idx])
    p = jnp.stack(patches, axis=2)                    # (B, C, prod(k), *out_spatial)
    L = int(math.prod(out_spatial))
    Kp = int(math.prod(kernel_size))
    return p.reshape(B, C * Kp, L), out_spatial


class VarConvNDJax:
    """Deterministically-initialized JAX/Pallas port of the PyTorch VarConvND module."""

    def __init__(self, kernel_size, padding, in_channels, out_channels, spatial,
                 ndims=2, stride=1, bias=True, key=None,
                 weight_stream_dtype=jnp.bfloat16):
        if isinstance(kernel_size, int):
            kernel_size = (kernel_size,) * ndims
        if isinstance(spatial, int):
            spatial = (spatial,) * ndims
        if isinstance(padding, int):
            padding = (padding,) * (2 * ndims)
        elif len(padding) == ndims:
            padding = tuple(itertools.chain(*[[padding[i]] * 2 for i in range(ndims)]))
        # TODO(synk): only the stride=1 fused-unfold path is implemented.
        assert stride == 1, "Pallas VarConvND currently implements stride=1 only"

        self.kernel_size = tuple(int(k) for k in kernel_size)
        self.spatial = tuple(int(s) for s in spatial)
        self.padding_pairs = tuple(
            (int(padding[2 * d]), int(padding[2 * d + 1])) for d in range(ndims))
        self.stride = stride
        self.ndims = ndims
        self.use_bias = bool(bias)
        self.in_channels = in_channels
        self.out_channels = out_channels
        self.weight_stream_dtype = weight_stream_dtype

        pad_sum = [self.padding_pairs[d][0] + self.padding_pairs[d][1] for d in range(ndims)]
        self.out_spatial = tuple(
            int((self.spatial[d] - self.kernel_size[d] + pad_sum[d]) // stride + 1)
            for d in range(ndims))
        self.in_spatial = list(self.out_spatial)       # torch module's name for it

        # Padded-input geometry: flat "pitch" layout where every kernel offset is a
        # constant lane shift (stride == 1).
        self.P = tuple(self.spatial[d] + pad_sum[d] for d in range(ndims))
        self.pitch_strides = tuple(pl.strides_from_shape(self.P))
        self.L = int(math.prod(self.P))
        self.koffs = tuple(
            int(sum(offs[d] * self.pitch_strides[d] for d in range(ndims)))
            for offs in itertools.product(*[range(k) for k in self.kernel_size]))
        self.koff_max = int(sum((self.kernel_size[d] - 1) * self.pitch_strides[d]
                                for d in range(ndims)))
        self.S_prime = int(sum((self.out_spatial[d] - 1) * self.pitch_strides[d]
                               for d in range(ndims)) + 1)

        S = int(math.prod(self.out_spatial))
        K = in_channels * int(math.prod(self.kernel_size))
        C = out_channels
        self.S, self.K, self.C = S, K, C

        if key is None:
            key = jax.random.PRNGKey(0)
        kw, kb = jax.random.split(key)
        # kaiming_normal_(nonlinearity='linear') on (S, K, C): fan_in = K * C
        self.weight = (jax.random.normal(kw, (S, K, C), dtype=jnp.float32)
                       / math.sqrt(K * C))
        if self.use_bias:
            # xavier_uniform on a tensor of shape out_spatial
            fi = self.out_spatial[-1]
            fo = int(math.prod(self.out_spatial[:-1]))
            bound = math.sqrt(6.0 / (fi + fo))
            self.bias = jax.random.uniform(kb, self.out_spatial, dtype=jnp.float32,
                                           minval=-bound, maxval=bound)
        else:
            self.bias = None

        self._stream_cache = {}   # s_blk -> (s_pad, w_stream, bt_stream)
        self._plan_cache = {}     # B     -> plan dict

    # ---- streaming layouts -----------------------------------------------------
    def _spread(self, a, s_pad):
        """Scatter a (rows, S) compact-output array into the padded-pitch flat layout
        (rows, s_pad); garbage lanes (padding columns) stay zero."""
        rows = a.shape[0]
        grid = jnp.zeros((rows,) + self.P, a.dtype)
        sel = (slice(None),) + tuple(slice(0, o) for o in self.out_spatial)
        grid = grid.at[sel].set(a.reshape((rows,) + self.out_spatial))
        flat = grid.reshape(rows, self.L)[:, :self.S_prime]
        return jnp.pad(flat, ((0, 0), (0, s_pad - self.S_prime)))

    def _prepare_stream(self, s_blk):
        if s_blk in self._stream_cache:
            return self._stream_cache[s_blk]
        s_pad = _round_up(self.S_prime, s_blk)
        K, C, S = self.K, self.C, self.S
        # Flat (K*C, S') bf16 weight slab: no (K, C) sublane padding in HBM or VMEM.
        w_kcs = jnp.transpose(self.weight, (1, 2, 0)).reshape(K * C, S)
        w_bf = w_kcs.astype(self.weight_stream_dtype)
        w_stream = self._spread(w_bf, s_pad)                               # (K*C, s_pad)
        # Folded bias: bt[c, s] = bias[s] * sum_k w[k, c, s]  (same rounded weights the
        # kernel streams, so it is exactly the reassociated torch bias term).
        if self.use_bias:
            w_sum = w_bf.astype(jnp.float32).reshape(K, C, S).sum(axis=0)  # (C, S)
            bt = self.bias.reshape(-1)[None, :] * w_sum
        else:
            bt = jnp.zeros((C, S), jnp.float32)
        bt_stream = self._spread(bt, s_pad)                                # (C, s_pad) f32
        entry = (s_pad, w_stream, bt_stream)
        self._stream_cache[s_blk] = entry
        return entry

    # ---- call-time planning ------------------------------------------------------
    def _per_lane_bytes(self, B, n_halo):
        # Double-buffered per-lane VMEM footprint of all streamed blocks.
        return 2 * (self.K * self.C * 2                 # bf16 weight tile (dominant)
                    + self.C * 4                        # bias-term tile
                    + B * self.C * 4                    # f32 output tile
                    + n_halo * B * self.in_channels * 4)  # halo'd input tiles

    def _plan(self, B):
        if B in self._plan_cache:
            return self._plan_cache[B]
        cap = _vmem_capacity_bytes()
        budget = min(int(cap * 0.35), 48 << 20)

        blk = 1024
        while True:
            n_halo = 1 + (-(-self.koff_max // blk) if self.koff_max > 0 else 0)
            if blk <= 128 or blk * self._per_lane_bytes(B, n_halo) <= budget:
                break
            blk -= 128
        # Keep >= ~4 grid steps so the "parallel" S axis shards across v7x's two
        # TensorCores and the weight DMA still pipelines per core.
        steps_cap = max(128, _round_up(-(-self.S_prime // 4), 128))
        blk = max(128, min(blk, steps_cap))
        n_halo = 1 + (-(-self.koff_max // blk) if self.koff_max > 0 else 0)

        s_pad, w_stream, bt_stream = self._prepare_stream(blk)

        est = self._per_lane_bytes(B, n_halo) * blk + (2 << 20)
        vmem_limit = max(est, 16 << 20)
        vmem_limit = min(vmem_limit, int(cap * 0.9))
        vmem_limit = max(vmem_limit, est)     # never below what the tiles need

        flops = 2 * B * self.C * self.K * s_pad
        bytes_accessed = (n_halo * B * self.in_channels * s_pad * 4   # fused-unfold reads
                          + w_stream.size * 2                         # bf16 weights
                          + bt_stream.size * 4
                          + B * self.C * s_pad * 4)                   # f32 output
        cost = pl.CostEstimate(flops=int(flops), transcendentals=0,
                               bytes_accessed=int(bytes_accessed))
        plan = dict(s_blk=blk, n_halo=n_halo, s_pad=s_pad, w=w_stream, bt=bt_stream,
                    vmem_limit=int(vmem_limit), cost=cost)
        self._plan_cache[B] = plan
        return plan

    # ---- forward -------------------------------------------------------------------
    def __call__(self, x):
        # x: (B, C_in, *spatial)  (NCHW for ndims=2)
        B = x.shape[0]
        plan = self._plan(B)
        s_blk, n_halo, s_pad = plan["s_blk"], plan["n_halo"], plan["s_pad"]

        # Conv padding + padded-pitch flattening (cheap; no im2col materialisation).
        xp = jnp.pad(x.astype(jnp.float32), ((0, 0), (0, 0)) + self.padding_pairs)
        x_flat = xp.reshape(B, self.in_channels, self.L)
        L_x = s_pad + (n_halo - 1) * s_blk
        x_flat = jnp.pad(x_flat, ((0, 0), (0, 0), (0, L_x - self.L)))

        out = varconv_pallas(x_flat, plan["w"], plan["bt"],
                             koffs=self.koffs, c_in=self.in_channels, c_out=self.C,
                             s_blk=s_blk, n_halo=n_halo,
                             vmem_limit_bytes=plan["vmem_limit"],
                             cost_estimate=plan["cost"])              # (B, C, s_pad)

        # Un-pitch: back to the padded spatial grid, crop the garbage lanes.
        if s_pad >= self.L:
            out = out[:, :, :self.L]
        else:
            out = jnp.pad(out, ((0, 0), (0, 0), (0, self.L - s_pad)))
        out = out.reshape((B, self.out_channels) + self.P)
        crop = (slice(None), slice(None)) + tuple(slice(0, o) for o in self.out_spatial)
        return out[crop]


# ------------------------------- main -------------------------------------------

if __name__ == "__main__":
    key = jax.random.PRNGKey(0)
    k_in, k_mod = jax.random.split(key)

    B, C_in, C_out = 2, 4, 8
    spatial = (16, 16)

    x = jax.random.normal(k_in, (B, C_in) + spatial, dtype=jnp.float32)

    mod = VarConvNDJax(kernel_size=3, padding=1, in_channels=C_in, out_channels=C_out,
                       spatial=spatial, ndims=2, stride=1, bias=True, key=k_mod)

    out = jax.block_until_ready(mod(x))

    # Reference: the torch forward (unfold -> + bias -> einsum 'bks,skc->bcs') in plain
    # JAX, using the same bf16-rounded weights the kernel streams.
    ufld, _ = unfold_nd(x, mod.kernel_size, mod.padding_pairs, mod.stride)   # (B, K, S)
    ufld = ufld + mod.bias.reshape(1, 1, -1)
    w_ref = mod.weight.astype(jnp.bfloat16).astype(jnp.float32)              # (S, K, C)
    ref = jnp.einsum('bks,skc->bcs', ufld, w_ref,
                     precision=jax.lax.Precision.HIGHEST)
    ref = ref.reshape((B, C_out) + mod.out_spatial)

    assert out.shape == (B, C_out) + mod.out_spatial, out.shape
    max_err = float(jnp.max(jnp.abs(out - ref)))
    assert jnp.allclose(out, ref, atol=2e-3, rtol=2e-3), max_err

    print("KERNEL_OK")
</pallas_src>

<mosaic_0001>
module attributes {stable_mosaic.version = 11 : i64} {
  func.func @kernel(%arg0: i32, %arg1: memref<2x4x128xf32, #tpu.memory_space<vmem>>, %arg2: memref<2x4x128xf32, #tpu.memory_space<vmem>>, %arg3: memref<288x128xbf16, #tpu.memory_space<vmem>>, %arg4: memref<8x128xf32, #tpu.memory_space<vmem>>, %arg5: memref<2x8x128xf32, #tpu.memory_space<vmem>>) attributes {dimension_semantics = [#tpu.dimension_semantics<parallel>], iteration_bounds = array<i64: 3>, scalar_prefetch = 0 : i64, scratch_operands = 0 : i64, tpu.core_type = #tpu.core_type<tc>, window_params = [{transform_indices = @transform_0, window_bounds = array<i64: 2, 4, 128>}, {transform_indices = @transform_1, window_bounds = array<i64: 2, 4, 128>}, {transform_indices = @transform_2, window_bounds = array<i64: 288, 128>}, {transform_indices = @transform_3, window_bounds = array<i64: 8, 128>}, {transform_indices = @transform_4, window_bounds = array<i64: 2, 8, 128>}]} {
    %c0 = arith.constant 0 : index
    %c0_0 = arith.constant 0 : index
    %0 = vector.load %arg4[%c0, %c0_0] : memref<8x128xf32, #tpu.memory_space<vmem>>, vector<8x128xf32>
    %1 = vector.shape_cast %0 : vector<8x128xf32> to vector<1x8x128xf32>
    %2 = vector.shape_cast %1 : vector<1x8x128xf32> to vector<1x8x128xf32>
    %3 = vector.broadcast %2 : vector<1x8x128xf32> to vector<2x8x128xf32>
    %c0_1 = arith.constant 0 : index
    %c0_2 = arith.constant 0 : index
    %c0_3 = arith.constant 0 : index
    %4 = vector.load %arg1[%c0_1, %c0_2, %c0_3] : memref<2x4x128xf32, #tpu.memory_space<vmem>>, vector<2x1x128xf32>
    %5 = vector.shape_cast %4 : vector<2x1x128xf32> to vector<2x128xf32>
    %c0_4 = arith.constant 0 : index
    %c0_5 = arith.constant 0 : index
    %c0_6 = arith.constant 0 : index
    %6 = vector.load %arg2[%c0_4, %c0_5, %c0_6] : memref<2x4x128xf32, #tpu.memory_space<vmem>>, vector<2x1x128xf32>
    %7 = vector.shape_cast %6 : vector<2x1x128xf32> to vector<2x128xf32>
    %8 = tpu.concatenate %5, %7 in 1 : vector<2x128xf32>, vector<2x128xf32> -> vector<2x256xf32>
    %9 = vector.extract_strided_slice %8 {offsets = [0, 0], sizes = [2, 128], strides = [1, 1]} : vector<2x256xf32> to vector<2x128xf32>
    %c0_7 = arith.constant 0 : index
    %c0_8 = arith.constant 0 : index
    %10 = vector.load %arg3[%c0_7, %c0_8] : memref<288x128xbf16, #tpu.memory_space<vmem>>, vector<8x128xbf16>
    %11 = arith.extf %10 : vector<8x128xbf16> to vector<8x128xf32>
    %12 = vector.shape_cast %9 : vector<2x128xf32> to vector<2x1x128xf32>
    %13 = vector.shape_cast %11 : vector<8x128xf32> to vector<1x8x128xf32>
    %14 = vector.broadcast %12 : vector<2x1x128xf32> to vector<2x8x128xf32>
    %15 = vector.broadcast %13 : vector<1x8x128xf32> to vector<2x8x128xf32>
    %16 = arith.mulf %14, %15 : vector<2x8x128xf32>
    %17 = arith.addf %3, %16 : vector<2x8x128xf32>
    %18 = vector.extract_strided_slice %8 {offsets = [0, 1], sizes = [2, 128], strides = [1, 1]} : vector<2x256xf32> to vector<2x128xf32>
    %c8 = arith.constant 8 : index
    %c0_9 = arith.constant 0 : index
    %19 = vector.load %arg3[%c8, %c0_9] : memref<288x128xbf16, #tpu.memory_space<vmem>>, vector<8x128xbf16>
    %20 = arith.extf %19 : vector<8x128xbf16> to vector<8x128xf32>
    %21 = vector.shape_cast %18 : vector<2x128xf32> to vector<2x1x128xf32>
    %22 = vector.shape_cast %20 : vector<8x128xf32> to vector<1x8x128xf32>
    %23 = vector.broadcast %21 : vector<2x1x128xf32> to vector<2x8x128xf32>
    %24 = vector.broadcast %22 : vector<1x8x128xf32> to vector<2x8x128xf32>
    %25 = arith.mulf %23, %24 : vector<2x8x128xf32>
    %26 = arith.addf %17, %25 : vector<2x8x128xf32>
    %27 = vector.extract_strided_slice %8 {offsets = [0, 2], sizes = [2, 128], strides = [1, 1]} : vector<2x256xf32> to vector<2x128xf32>
    %c16 = arith.constant 16 : index
    %c0_10 = arith.constant 0 : index
    %28 = vector.load %arg3[%c16, %c0_10] : memref<288x128xbf16, #tpu.memory_space<vmem>>, vector<8x128xbf16>
    %29 = arith.extf %28 : vector<8x128xbf16> to vector<8x128xf32>
    %30 = vector.shape_cast %27 : vector<2x128xf32> to vector<2x1x128xf32>
    %31 = vector.shape_cast %29 : vector<8x128xf32> to vector<1x8x128xf32>
    %32 = vector.broadcast %30 : vector<2x1x128xf32> to vector<2x8x128xf32>
    %33 = vector.broadcast %31 : vector<1x8x128xf32> to vector<2x8x128xf32>
    %34 = arith.mulf %32, %33 : vector<2x8x128xf32>
    %35 = arith.addf %26, %34 : vector<2x8x128xf32>
    %36 = vector.extract_strided_slice %8 {offsets = [0, 18], sizes = [2, 128], strides = [1, 1]} : vector<2x256xf32> to vector<2x128xf32>
    %c24 = arith.constant 24 : index
    %c0_11 = arith.constant 0 : index
    %37 = vector.load %arg3[%c24, %c0_11] : memref<288x128xbf16, #tpu.memory_space<vmem>>, vector<8x128xbf16>
    %38 = arith.extf %37 : vector<8x128xbf16> to vector<8x128xf32>
    %39 = vector.shape_cast %36 : vector<2x128xf32> to vector<2x1x128xf32>
    %40 = vector.shape_cast %38 : vector<8x128xf32> to vector<1x8x128xf32>
    %41 = vector.broadcast %39 : vector<2x1x128xf32> to vector<2x8x128xf32>
    %42 = vector.broadcast %40 : vector<1x8x128xf32> to vector<2x8x128xf32>
    %43 = arith.mulf %41, %42 : vector<2x8x128xf32>
    %44 = arith.addf %35, %43 : vector<2x8x128xf32>
    %45 = vector.extract_strided_slice %8 {offsets = [0, 19], sizes = [2, 128], strides = [1, 1]} : vector<2x256xf32> to vector<2x128xf32>
    %c32 = arith.constant 32 : index
    %c0_12 = arith.constant 0 : index
    %46 = vector.load %arg3[%c32, %c0_12] : memref<288x128xbf16, #tpu.memory_space<vmem>>, vector<8x128xbf16>
    %47 = arith.extf %46 : vector<8x128xbf16> to vector<8x128xf32>
    %48 = vector.shape_cast %45 : vector<2x128xf32> to vector<2x1x128xf32>
    %49 = vector.shape_cast %47 : vector<8x128xf32> to vector<1x8x128xf32>
    %50 = vector.broadcast %48 : vector<2x1x128xf32> to vector<2x8x128xf32>
    %51 = vector.broadcast %49 : vector<1x8x128xf32> to vector<2x8x128xf32>
    %52 = arith.mulf %50, %51 : vector<2x8x128xf32>
    %53 = arith.addf %44, %52 : vector<2x8x128xf32>
    %54 = vector.extract_strided_slice %8 {offsets = [0, 20], sizes = [2, 128], strides = [1, 1]} : vector<2x256xf32> to vector<2x128xf32>
    %c40 = arith.constant 40 : index
    %c0_13 = arith.constant 0 : index
    %55 = vector.load %arg3[%c40, %c0_13] : memref<288x128xbf16, #tpu.memory_space<vmem>>, vector<8x128xbf16>
    %56 = arith.extf %55 : vector<8x128xbf16> to vector<8x128xf32>
    %57 = vector.shape_cast %54 : vector<2x128xf32> to vector<2x1x128xf32>
    %58 = vector.shape_cast %56 : vector<8x128xf32> to vector<1x8x128xf32>
    %59 = vector.broadcast %57 : vector<2x1x128xf32> to vector<2x8x128xf32>
    %60 = vector.broadcast %58 : vector<1x8x128xf32> to vector<2x8x128xf32>
    %61 = arith.mulf %59, %60 : vector<2x8x128xf32>
    %62 = arith.addf %53, %61 : vector<2x8x128xf32>
    %63 = vector.extract_strided_slice %8 {offsets = [0, 36], sizes = [2, 128], strides = [1, 1]} : vector<2x256xf32> to vector<2x128xf32>
    %c48 = arith.constant 48 : index
    %c0_14 = arith.constant 0 : index
    %64 = vector.load %arg3[%c48, %c0_14] : memref<288x128xbf16, #tpu.memory_space<vmem>>, vector<8x128xbf16>
    %65 = arith.extf %64 : vector<8x128xbf16> to vector<8x128xf32>
    %66 = vector.shape_cast %63 : vector<2x128xf32> to vector<2x1x128xf32>
    %67 = vector.shape_cast %65 : vector<8x128xf32> to vector<1x8x128xf32>
    %68 = vector.broadcast %66 : vector<2x1x128xf32> to vector<2x8x128xf32>
    %69 = vector.broadcast %67 : vector<1x8x128xf32> to vector<2x8x128xf32>
    %70 = arith.mulf %68, %69 : vector<2x8x128xf32>
    %71 = arith.addf %62, %70 : vector<2x8x128xf32>
    %72 = vector.extract_strided_slice %8 {offsets = [0, 37], sizes = [2, 128], strides = [1, 1]} : vector<2x256xf32> to vector<2x128xf32>
    %c56 = arith.constant 56 : index
    %c0_15 = arith.constant 0 : index
    %73 = vector.load %arg3[%c56, %c0_15] : memref<288x128xbf16, #tpu.memory_space<vmem>>, vector<8x128xbf16>
    %74 = arith.extf %73 : vector<8x128xbf16> to vector<8x128xf32>
    %75 = vector.shape_cast %72 : vector<2x128xf32> to vector<2x1x128xf32>
    %76 = vector.shape_cast %74 : vector<8x128xf32> to vector<1x8x128xf32>
    %77 = vector.broadcast %75 : vector<2x1x128xf32> to vector<2x8x128xf32>
    %78 = vector.broadcast %76 : vector<1x8x128xf32> to vector<2x8x128xf32>
    %79 = arith.mulf %77, %78 : vector<2x8x128xf32>
    %80 = arith.addf %71, %79 : vector<2x8x128xf32>
    %81 = vector.extract_strided_slice %8 {offsets = [0, 38], sizes = [2, 128], strides = [1, 1]} : vector<2x256xf32> to vector<2x128xf32>
    %c64 = arith.constant 64 : index
    %c0_16 = arith.constant 0 : index
    %82 = vector.load %arg3[%c64, %c0_16] : memref<288x128xbf16, #tpu.memory_space<vmem>>, vector<8x128xbf16>
    %83 = arith.extf %82 : vector<8x128xbf16> to vector<8x128xf32>
    %84 = vector.shape_cast %81 : vector<2x128xf32> to vector<2x1x128xf32>
    %85 = vector.shape_cast %83 : vector<8x128xf32> to vector<1x8x128xf32>
    %86 = vector.broadcast %84 : vector<2x1x128xf32> to vector<2x8x128xf32>
    %87 = vector.broadcast %85 : vector<1x8x128xf32> to vector<2x8x128xf32>
    %88 = arith.mulf %86, %87 : vector<2x8x128xf32>
    %89 = arith.addf %80, %88 : vector<2x8x128xf32>
    %c0_17 = arith.constant 0 : index
    %c1 = arith.constant 1 : index
    %c0_18 = arith.constant 0 : index
    %90 = vector.load %arg1[%c0_17, %c1, %c0_18] : memref<2x4x128xf32, #tpu.memory_space<vmem>>, vector<2x1x128xf32>
    %91 = vector.shape_cast %90 : vector<2x1x128xf32> to vector<2x128xf32>
    %c0_19 = arith.constant 0 : index
    %c1_20 = arith.constant 1 : index
    %c0_21 = arith.constant 0 : index
    %92 = vector.load %arg2[%c0_19, %c1_20, %c0_21] : memref<2x4x128xf32, #tpu.memory_space<vmem>>, vector<2x1x128xf32>
    %93 = vector.shape_cast %92 : vector<2x1x128xf32> to vector<2x128xf32>
    %94 = tpu.concatenate %91, %93 in 1 : vector<2x128xf32>, vector<2x128xf32> -> vector<2x256xf32>
    %95 = vector.extract_strided_slice %94 {offsets = [0, 0], sizes = [2, 128], strides = [1, 1]} : vector<2x256xf32> to vector<2x128xf32>
    %c72 = arith.constant 72 : index
    %c0_22 = arith.constant 0 : index
    %96 = vector.load %arg3[%c72, %c0_22] : memref<288x128xbf16, #tpu.memory_space<vmem>>, vector<8x128xbf16>
    %97 = arith.extf %96 : vector<8x128xbf16> to vector<8x128xf32>
    %98 = vector.shape_cast %95 : vector<2x128xf32> to vector<2x1x128xf32>
    %99 = vector.shape_cast %97 : vector<8x128xf32> to vector<1x8x128xf32>
    %100 = vector.broadcast %98 : vector<2x1x128xf32> to vector<2x8x128xf32>
    %101 = vector.broadcast %99 : vector<1x8x128xf32> to vector<2x8x128xf32>
    %102 = arith.mulf %100, %101 : vector<2x8x128xf32>
    %103 = arith.addf %89, %102 : vector<2x8x128xf32>
    %104 = vector.extract_strided_slice %94 {offsets = [0, 1], sizes = [2, 128], strides = [1, 1]} : vector<2x256xf32> to vector<2x128xf32>
    %c80 = arith.constant 80 : index
    %c0_23 = arith.constant 0 : index
    %105 = vector.load %arg3[%c80, %c0_23] : memref<288x128xbf16, #tpu.memory_space<vmem>>, vector<8x128xbf16>
    %106 = arith.extf %105 : vector<8x128xbf16> to vector<8x128xf32>
    %107 = vector.shape_cast %104 : vector<2x128xf32> to vector<2x1x128xf32>
    %108 = vector.shape_cast %106 : vector<8x128xf32> to vector<1x8x128xf32>
    %109 = vector.broadcast %107 : vector<2x1x128xf32> to vector<2x8x128xf32>
    %110 = vector.broadcast %108 : vector<1x8x128xf32> to vector<2x8x128xf32>
    %111 = arith.mulf %109, %110 : vector<2x8x128xf32>
    %112 = arith.addf %103, %111 : vector<2x8x128xf32>
    %113 = vector.extract_strided_slice %94 {offsets = [0, 2], sizes = [2, 128], strides = [1, 1]} : vector<2x256xf32> to vector<2x128xf32>
    %c88 = arith.constant 88 : index
    %c0_24 = arith.constant 0 : index
    %114 = vector.load %arg3[%c88, %c0_24] : memref<288x128xbf16, #tpu.memory_space<vmem>>, vector<8x128xbf16>
    %115 = arith.extf %114 : vector<8x128xbf16> to vector<8x128xf32>
    %116 = vector.shape_cast %113 : vector<2x128xf32> to vector<2x1x128xf32>
    %117 = vector.shape_cast %115 : vector<8x128xf32> to vector<1x8x128xf32>
    %118 = vector.broadcast %116 : vector<2x1x128xf32> to vector<2x8x128xf32>
    %119 = vector.broadcast %117 : vector<1x8x128xf32> to vector<2x8x128xf32>
    %120 = arith.mulf %118, %119 : vector<2x8x128xf32>
    %121 = arith.addf %112, %120 : vector<2x8x128xf32>
    %122 = vector.extract_strided_slice %94 {offsets = [0, 18], sizes = [2, 128], strides = [1, 1]} : vector<2x256xf32> to vector<2x128xf32>
    %c96 = arith.constant 96 : index
    %c0_25 = arith.constant 0 : index
    %123 = vector.load %arg3[%c96, %c0_25] : memref<288x128xbf16, #tpu.memory_space<vmem>>, vector<8x128xbf16>
    %124 = arith.extf %123 : vector<8x128xbf16> to vector<8x128xf32>
    %125 = vector.shape_cast %122 : vector<2x128xf32> to vector<2x1x128xf32>
    %126 = vector.shape_cast %124 : vector<8x128xf32> to vector<1x8x128xf32>
    %127 = vector.broadcast %125 : vector<2x1x128xf32> to vector<2x8x128xf32>
    %128 = vector.broadcast %126 : vector<1x8x128xf32> to vector<2x8x128xf32>
    %129 = arith.mulf %127, %128 : vector<2x8x128xf32>
    %130 = arith.addf %121, %129 : vector<2x8x128xf32>
    %131 = vector.extract_strided_slice %94 {offsets = [0, 19], sizes = [2, 128], strides = [1, 1]} : vector<2x256xf32> to vector<2x128xf32>
    %c104 = arith.constant 104 : index
    %c0_26 = arith.constant 0 : index
    %132 = vector.load %arg3[%c104, %c0_26] : memref<288x128xbf16, #tpu.memory_space<vmem>>, vector<8x128xbf16>
    %133 = arith.extf %132 : vector<8x128xbf16> to vector<8x128xf32>
    %134 = vector.shape_cast %131 : vector<2x128xf32> to vector<2x1x128xf32>
    %135 = vector.shape_cast %133 : vector<8x128xf32> to vector<1x8x128xf32>
    %136 = vector.broadcast %134 : vector<2x1x128xf32> to vector<2x8x128xf32>
    %137 = vector.broadcast %135 : vector<1x8x128xf32> to vector<2x8x128xf32>
    %138 = arith.mulf %136, %137 : vector<2x8x128xf32>
    %139 = arith.addf %130, %138 : vector<2x8x128xf32>
    %140 = vector.extract_strided_slice %94 {offsets = [0, 20], sizes = [2, 128], strides = [1, 1]} : vector<2x256xf32> to vector<2x128xf32>
    %c112 = arith.constant 112 : index
    %c0_27 = arith.constant 0 : index
    %141 = vector.load %arg3[%c112, %c0_27] : memref<288x128xbf16, #tpu.memory_space<vmem>>, vector<8x128xbf16>
    %142 = arith.extf %141 : vector<8x128xbf16> to vector<8x128xf32>
    %143 = vector.shape_cast %140 : vector<2x128xf32> to vector<2x1x128xf32>
    %144 = vector.shape_cast %142 : vector<8x128xf32> to vector<1x8x128xf32>
    %145 = vector.broadcast %143 : vector<2x1x128xf32> to vector<2x8x128xf32>
    %146 = vector.broadcast %144 : vector<1x8x128xf32> to vector<2x8x128xf32>
    %147 = arith.mulf %145, %146 : vector<2x8x128xf32>
    %148 = arith.addf %139, %147 : vector<2x8x128xf32>
    %149 = vector.extract_strided_slice %94 {offsets = [0, 36], sizes = [2, 128], strides = [1, 1]} : vector<2x256xf32> to vector<2x128xf32>
    %c120 = arith.constant 120 : index
    %c0_28 = arith.constant 0 : index
    %150 = vector.load %arg3[%c120, %c0_28] : memref<288x128xbf16, #tpu.memory_space<vmem>>, vector<8x128xbf16>
    %151 = arith.extf %150 : vector<8x128xbf16> to vector<8x128xf32>
    %152 = vector.shape_cast %149 : vector<2x128xf32> to vector<2x1x128xf32>
    %153 = vector.shape_cast %151 : vector<8x128xf32> to vector<1x8x128xf32>
    %154 = vector.broadcast %152 : vector<2x1x128xf32> to vector<2x8x128xf32>
    %155 = vector.broadcast %153 : vector<1x8x128xf32> to vector<2x8x128xf32>
    %156 = arith.mulf %154, %155 : vector<2x8x128xf32>
    %157 = arith.addf %148, %156 : vector<2x8x128xf32>
    %158 = vector.extract_strided_slice %94 {offsets = [0, 37], sizes = [2, 128], strides = [1, 1]} : vector<2x256xf32> to vector<2x128xf32>
    %c128 = arith.constant 128 : index
    %c0_29 = arith.constant 0 : index
    %159 = vector.load %arg3[%c128, %c0_29] : memref<288x128xbf16, #tpu.memory_space<vmem>>, vector<8x128xbf16>
    %160 = arith.extf %159 : vector<8x128xbf16> to vector<8x128xf32>
    %161 = vector.shape_cast %158 : vector<2x128xf32> to vector<2x1x128xf32>
    %162 = vector.shape_cast %160 : vector<8x128xf32> to vector<1x8x128xf32>
    %163 = vector.broadcast %161 : vector<2x1x128xf32> to vector<2x8x128xf32>
    %164 = vector.broadcast %162 : vector<1x8x128xf32> to vector<2x8x128xf32>
    %165 = arith.mulf %163, %164 : vector<2x8x128xf32>
    %166 = arith.addf %157, %165 : vector<2x8x128xf32>
    %167 = vector.extract_strided_slice %94 {offsets = [0, 38], sizes = [2, 128], strides = [1, 1]} : vector<2x256xf32> to vector<2x128xf32>
    %c136 = arith.constant 136 : index
    %c0_30 = arith.constant 0 : index
    %168 = vector.load %arg3[%c136, %c0_30] : memref<288x128xbf16, #tpu.memory_space<vmem>>, vector<8x128xbf16>
    %169 = arith.extf %168 : vector<8x128xbf16> to vector<8x128xf32>
    %170 = vector.shape_cast %167 : vector<2x128xf32> to vector<2x1x128xf32>
    %171 = vector.shape_cast %169 : vector<8x128xf32> to vector<1x8x128xf32>
    %172 = vector.broadcast %170 : vector<2x1x128xf32> to vector<2x8x128xf32>
    %173 = vector.broadcast %171 : vector<1x8x128xf32> to vector<2x8x128xf32>
    %174 = arith.mulf %172, %173 : vector<2x8x128xf32>
    %175 = arith.addf %166, %174 : vector<2x8x128xf32>
    %c0_31 = arith.constant 0 : index
    %c2 = arith.constant 2 : index
    %c0_32 = arith.constant 0 : index
    %176 = vector.load %arg1[%c0_31, %c2, %c0_32] : memref<2x4x128xf32, #tpu.memory_space<vmem>>, vector<2x1x128xf32>
    %177 = vector.shape_cast %176 : vector<2x1x128xf32> to vector<2x128xf32>
    %c0_33 = arith.constant 0 : index
    %c2_34 = arith.constant 2 : index
    %c0_35 = arith.constant 0 : index
    %178 = vector.load %arg2[%c0_33, %c2_34, %c0_35] : memref<2x4x128xf32, #tpu.memory_space<vmem>>, vector<2x1x128xf32>
    %179 = vector.shape_cast %178 : vector<2x1x128xf32> to vector<2x128xf32>
    %180 = tpu.concatenate %177, %179 in 1 : vector<2x128xf32>, vector<2x128xf32> -> vector<2x256xf32>
    %181 = vector.extract_strided_slice %180 {offsets = [0, 0], sizes = [2, 128], strides = [1, 1]} : vector<2x256xf32> to vector<2x128xf32>
    %c144 = arith.constant 144 : index
    %c0_36 = arith.constant 0 : index
    %182 = vector.load %arg3[%c144, %c0_36] : memref<288x128xbf16, #tpu.memory_space<vmem>>, vector<8x128xbf16>
    %183 = arith.extf %182 : vector<8x128xbf16> to vector<8x128xf32>
    %184 = vector.shape_cast %181 : vector<2x128xf32> to vector<2x1x128xf32>
    %185 = vector.shape_cast %183 : vector<8x128xf32> to vector<1x8x128xf32>
    %186 = vector.broadcast %184 : vector<2x1x128xf32> to vector<2x8x128xf32>
    %187 = vector.broadcast %185 : vector<1x8x128xf32> to vector<2x8x128xf32>
    %188 = arith.mulf %186, %187 : vector<2x8x128xf32>
    %189 = arith.addf %175, %188 : vector<2x8x128xf32>
    %190 = vector.extract_strided_slice %180 {offsets = [0, 1], sizes = [2, 128], strides = [1, 1]} : vector<2x256xf32> to vector<2x128xf32>
    %c152 = arith.constant 152 : index
    %c0_37 = arith.constant 0 : index
    %191 = vector.load %arg3[%c152, %c0_37] : memref<288x128xbf16, #tpu.memory_space<vmem>>, vector<8x128xbf16>
    %192 = arith.extf %191 : vector<8x128xbf16> to vector<8x128xf32>
    %193 = vector.shape_cast %190 : vector<2x128xf32> to vector<2x1x128xf32>
    %194 = vector.shape_cast %192 : vector<8x128xf32> to vector<1x8x128xf32>
    %195 = vector.broadcast %193 : vector<2x1x128xf32> to vector<2x8x128xf32>
    %196 = vector.broadcast %194 : vector<1x8x128xf32> to vector<2x8x128xf32>
    %197 = arith.mulf %195, %196 : vector<2x8x128xf32>
    %198 = arith.addf %189, %197 : vector<2x8x128xf32>
    %199 = vector.extract_strided_slice %180 {offsets = [0, 2], sizes = [2, 128], strides = [1, 1]} : vector<2x256xf32> to vector<2x128xf32>
    %c160 = arith.constant 160 : index
    %c0_38 = arith.constant 0 : index
    %200 = vector.load %arg3[%c160, %c0_38] : memref<288x128xbf16, #tpu.memory_space<vmem>>, vector<8x128xbf16>
    %201 = arith.extf %200 : vector<8x128xbf16> to vector<8x128xf32>
    %202 = vector.shape_cast %199 : vector<2x128xf32> to vector<2x1x128xf32>
    %203 = vector.shape_cast %201 : vector<8x128xf32> to vector<1x8x128xf32>
    %204 = vector.broadcast %202 : vector<2x1x128xf32> to vector<2x8x128xf32>
    %205 = vector.broadcast %203 : vector<1x8x128xf32> to vector<2x8x128xf32>
    %206 = arith.mulf %204, %205 : vector<2x8x128xf32>
    %207 = arith.addf %198, %206 : vector<2x8x128xf32>
    %208 = vector.extract_strided_slice %180 {offsets = [0, 18], sizes = [2, 128], strides = [1, 1]} : vector<2x256xf32> to vector<2x128xf32>
    %c168 = arith.constant 168 : index
    %c0_39 = arith.constant 0 : index
    %209 = vector.load %arg3[%c168, %c0_39] : memref<288x128xbf16, #tpu.memory_space<vmem>>, vector<8x128xbf16>
    %210 = arith.extf %209 : vector<8x128xbf16> to vector<8x128xf32>
    %211 = vector.shape_cast %208 : vector<2x128xf32> to vector<2x1x128xf32>
    %212 = vector.shape_cast %210 : vector<8x128xf32> to vector<1x8x128xf32>
    %213 = vector.broadcast %211 : vector<2x1x128xf32> to vector<2x8x128xf32>
    %214 = vector.broadcast %212 : vector<1x8x128xf32> to vector<2x8x128xf32>
    %215 = arith.mulf %213, %214 : vector<2x8x128xf32>
    %216 = arith.addf %207, %215 : vector<2x8x128xf32>
    %217 = vector.extract_strided_slice %180 {offsets = [0, 19], sizes = [2, 128], strides = [1, 1]} : vector<2x256xf32> to vector<2x128xf32>
    %c176 = arith.constant 176 : index
    %c0_40 = arith.constant 0 : index
    %218 = vector.load %arg3[%c176, %c0_40] : memref<288x128xbf16, #tpu.memory_space<vmem>>, vector<8x128xbf16>
    %219 = arith.extf %218 : vector<8x128xbf16> to vector<8x128xf32>
    %220 = vector.shape_cast %217 : vector<2x128xf32> to vector<2x1x128xf32>
    %221 = vector.shape_cast %219 : vector<8x128xf32> to vector<1x8x128xf32>
    %222 = vector.broadcast %220 : vector<2x1x128xf32> to vector<2x8x128xf32>
    %223 = vector.broadcast %221 : vector<1x8x128xf32> to vector<2x8x128xf32>
    %224 = arith.mulf %222, %223 : vector<2x8x128xf32>
    %225 = arith.addf %216, %224 : vector<2x8x128xf32>
    %226 = vector.extract_strided_slice %180 {offsets = [0, 20], sizes = [2, 128], strides = [1, 1]} : vector<2x256xf32> to vector<2x128xf32>
    %c184 = arith.constant 184 : index
    %c0_41 = arith.constant 0 : index
    %227 = vector.load %arg3[%c184, %c0_41] : memref<288x128xbf16, #tpu.memory_space<vmem>>, vector<8x128xbf16>
    %228 = arith.extf %227 : vector<8x128xbf16> to vector<8x128xf32>
    %229 = vector.shape_cast %226 : vector<2x128xf32> to vector<2x1x128xf32>
    %230 = vector.shape_cast %228 : vector<8x128xf32> to vector<1x8x128xf32>
    %231 = vector.broadcast %229 : vector<2x1x128xf32> to vector<2x8x128xf32>
    %232 = vector.broadcast %230 : vector<1x8x128xf32> to vector<2x8x128xf32>
    %233 = arith.mulf %231, %232 : vector<2x8x128xf32>
    %234 = arith.addf %225, %233 : vector<2x8x128xf32>
    %235 = vector.extract_strided_slice %180 {offsets = [0, 36], sizes = [2, 128], strides = [1, 1]} : vector<2x256xf32> to vector<2x128xf32>
    %c192 = arith.constant 192 : index
    %c0_42 = arith.constant 0 : index
    %236 = vector.load %arg3[%c192, %c0_42] : memref<288x128xbf16, #tpu.memory_space<vmem>>, vector<8x128xbf16>
    %237 = arith.extf %236 : vector<8x128xbf16> to vector<8x128xf32>
    %238 = vector.shape_cast %235 : vector<2x128xf32> to vector<2x1x128xf32>
    %239 = vector.shape_cast %237 : vector<8x128xf32> to vector<1x8x128xf32>
    %240 = vector.broadcast %238 : vector<2x1x128xf32> to vector<2x8x128xf32>
    %241 = vector.broadcast %239 : vector<1x8x128xf32> to vector<2x8x128xf32>
    %242 = arith.mulf %240, %241 : vector<2x8x128xf32>
    %243 = arith.addf %234, %242 : vector<2x8x128xf32>
    %244 = vector.extract_strided_slice %180 {offsets = [0, 37], sizes = [2, 128], strides = [1, 1]} : vector<2x256xf32> to vector<2x128xf32>
    %c200 = arith.constant 200 : index
    %c0_43 = arith.constant 0 : index
    %245 = vector.load %arg3[%c200, %c0_43] : memref<288x128xbf16, #tpu.memory_space<vmem>>, vector<8x128xbf16>
    %246 = arith.extf %245 : vector<8x128xbf16> to vector<8x128xf32>
    %247 = vector.shape_cast %244 : vector<2x128xf32> to vector<2x1x128xf32>
    %248 = vector.shape_cast %246 : vector<8x128xf32> to vector<1x8x128xf32>
    %249 = vector.broadcast %247 : vector<2x1x128xf32> to vector<2x8x128xf32>
    %250 = vector.broadcast %248 : vector<1x8x128xf32> to vector<2x8x128xf32>
    %251 = arith.mulf %249, %250 : vector<2x8x128xf32>
    %252 = arith.addf %243, %251 : vector<2x8x128xf32>
    %253 = vector.extract_strided_slice %180 {offsets = [0, 38], sizes = [2, 128], strides = [1, 1]} : vector<2x256xf32> to vector<2x128xf32>
    %c208 = arith.constant 208 : index
    %c0_44 = arith.constant 0 : index
    %254 = vector.load %arg3[%c208, %c0_44] : memref<288x128xbf16, #tpu.memory_space<vmem>>, vector<8x128xbf16>
    %255 = arith.extf %254 : vector<8x128xbf16> to vector<8x128xf32>
    %256 = vector.shape_cast %253 : vector<2x128xf32> to vector<2x1x128xf32>
    %257 = vector.shape_cast %255 : vector<8x128xf32> to vector<1x8x128xf32>
    %258 = vector.broadcast %256 : vector<2x1x128xf32> to vector<2x8x128xf32>
    %259 = vector.broadcast %257 : vector<1x8x128xf32> to vector<2x8x128xf32>
    %260 = arith.mulf %258, %259 : vector<2x8x128xf32>
    %261 = arith.addf %252, %260 : vector<2x8x128xf32>
    %c0_45 = arith.constant 0 : index
    %c3 = arith.constant 3 : index
    %c0_46 = arith.constant 0 : index
    %262 = vector.load %arg1[%c0_45, %c3, %c0_46] : memref<2x4x128xf32, #tpu.memory_space<vmem>>, vector<2x1x128xf32>
    %263 = vector.shape_cast %262 : vector<2x1x128xf32> to vector<2x128xf32>
    %c0_47 = arith.constant 0 : index
    %c3_48 = arith.constant 3 : index
    %c0_49 = arith.constant 0 : index
    %264 = vector.load %arg2[%c0_47, %c3_48, %c0_49] : memref<2x4x128xf32, #tpu.memory_space<vmem>>, vector<2x1x128xf32>
    %265 = vector.shape_cast %264 : vector<2x1x128xf32> to vector<2x128xf32>
    %266 = tpu.concatenate %263, %265 in 1 : vector<2x128xf32>, vector<2x128xf32> -> vector<2x256xf32>
    %267 = vector.extract_strided_slice %266 {offsets = [0, 0], sizes = [2, 128], strides = [1, 1]} : vector<2x256xf32> to vector<2x128xf32>
    %c216 = arith.constant 216 : index
    %c0_50 = arith.constant 0 : index
    %268 = vector.load %arg3[%c216, %c0_50] : memref<288x128xbf16, #tpu.memory_space<vmem>>, vector<8x128xbf16>
    %269 = arith.extf %268 : vector<8x128xbf16> to vector<8x128xf32>
    %270 = vector.shape_cast %267 : vector<2x128xf32> to vector<2x1x128xf32>
    %271 = vector.shape_cast %269 : vector<8x128xf32> to vector<1x8x128xf32>
    %272 = vector.broadcast %270 : vector<2x1x128xf32> to vector<2x8x128xf32>
    %273 = vector.broadcast %271 : vector<1x8x128xf32> to vector<2x8x128xf32>
    %274 = arith.mulf %272, %273 : vector<2x8x128xf32>
    %275 = arith.addf %261, %274 : vector<2x8x128xf32>
    %276 = vector.extract_strided_slice %266 {offsets = [0, 1], sizes = [2, 128], strides = [1, 1]} : vector<2x256xf32> to vector<2x128xf32>
    %c224 = arith.constant 224 : index
    %c0_51 = arith.constant 0 : index
    %277 = vector.load %arg3[%c224, %c0_51] : memref<288x128xbf16, #tpu.memory_space<vmem>>, vector<8x128xbf16>
    %278 = arith.extf %277 : vector<8x128xbf16> to vector<8x128xf32>
    %279 = vector.shape_cast %276 : vector<2x128xf32> to vector<2x1x128xf32>
    %280 = vector.shape_cast %278 : vector<8x128xf32> to vector<1x8x128xf32>
    %281 = vector.broadcast %279 : vector<2x1x128xf32> to vector<2x8x128xf32>
    %282 = vector.broadcast %280 : vector<1x8x128xf32> to vector<2x8x128xf32>
    %283 = arith.mulf %281, %282 : vector<2x8x128xf32>
    %284 = arith.addf %275, %283 : vector<2x8x128xf32>
    %285 = vector.extract_strided_slice %266 {offsets = [0, 2], sizes = [2, 128], strides = [1, 1]} : vector<2x256xf32> to vector<2x128xf32>
    %c232 = arith.constant 232 : index
    %c0_52 = arith.constant 0 : index
    %286 = vector.load %arg3[%c232, %c0_52] : memref<288x128xbf16, #tpu.memory_space<vmem>>, vector<8x128xbf16>
    %287 = arith.extf %286 : vector<8x128xbf16> to vector<8x128xf32>
    %288 = vector.shape_cast %285 : vector<2x128xf32> to vector<2x1x128xf32>
    %289 = vector.shape_cast %287 : vector<8x128xf32> to vector<1x8x128xf32>
    %290 = vector.broadcast %288 : vector<2x1x128xf32> to vector<2x8x128xf32>
    %291 = vector.broadcast %289 : vector<1x8x128xf32> to vector<2x8x128xf32>
    %292 = arith.mulf %290, %291 : vector<2x8x128xf32>
    %293 = arith.addf %284, %292 : vector<2x8x128xf32>
    %294 = vector.extract_strided_slice %266 {offsets = [0, 18], sizes = [2, 128], strides = [1, 1]} : vector<2x256xf32> to vector<2x128xf32>
    %c240 = arith.constant 240 : index
    %c0_53 = arith.constant 0 : index
    %295 = vector.load %arg3[%c240, %c0_53] : memref<288x128xbf16, #tpu.memory_space<vmem>>, vector<8x128xbf16>
    %296 = arith.extf %295 : vector<8x128xbf16> to vector<8x128xf32>
    %297 = vector.shape_cast %294 : vector<2x128xf32> to vector<2x1x128xf32>
    %298 = vector.shape_cast %296 : vector<8x128xf32> to vector<1x8x128xf32>
    %299 = vector.broadcast %297 : vector<2x1x128xf32> to vector<2x8x128xf32>
    %300 = vector.broadcast %298 : vector<1x8x128xf32> to vector<2x8x128xf32>
    %301 = arith.mulf %299, %300 : vector<2x8x128xf32>
    %302 = arith.addf %293, %301 : vector<2x8x128xf32>
    %303 = vector.extract_strided_slice %266 {offsets = [0, 19], sizes = [2, 128], strides = [1, 1]} : vector<2x256xf32> to vector<2x128xf32>
    %c248 = arith.constant 248 : index
    %c0_54 = arith.constant 0 : index
    %304 = vector.load %arg3[%c248, %c0_54] : memref<288x128xbf16, #tpu.memory_space<vmem>>, vector<8x128xbf16>
    %305 = arith.extf %304 : vector<8x128xbf16> to vector<8x128xf32>
    %306 = vector.shape_cast %303 : vector<2x128xf32> to vector<2x1x128xf32>
    %307 = vector.shape_cast %305 : vector<8x128xf32> to vector<1x8x128xf32>
    %308 = vector.broadcast %306 : vector<2x1x128xf32> to vector<2x8x128xf32>
    %309 = vector.broadcast %307 : vector<1x8x128xf32> to vector<2x8x128xf32>
    %310 = arith.mulf %308, %309 : vector<2x8x128xf32>
    %311 = arith.addf %302, %310 : vector<2x8x128xf32>
    %312 = vector.extract_strided_slice %266 {offsets = [0, 20], sizes = [2, 128], strides = [1, 1]} : vector<2x256xf32> to vector<2x128xf32>
    %c256 = arith.constant 256 : index
    %c0_55 = arith.constant 0 : index
    %313 = vector.load %arg3[%c256, %c0_55] : memref<288x128xbf16, #tpu.memory_space<vmem>>, vector<8x128xbf16>
    %314 = arith.extf %313 : vector<8x128xbf16> to vector<8x128xf32>
    %315 = vector.shape_cast %312 : vector<2x128xf32> to vector<2x1x128xf32>
    %316 = vector.shape_cast %314 : vector<8x128xf32> to vector<1x8x128xf32>
    %317 = vector.broadcast %315 : vector<2x1x128xf32> to vector<2x8x128xf32>
    %318 = vector.broadcast %316 : vector<1x8x128xf32> to vector<2x8x128xf32>
    %319 = arith.mulf %317, %318 : vector<2x8x128xf32>
    %320 = arith.addf %311, %319 : vector<2x8x128xf32>
    %321 = vector.extract_strided_slice %266 {offsets = [0, 36], sizes = [2, 128], strides = [1, 1]} : vector<2x256xf32> to vector<2x128xf32>
    %c264 = arith.constant 264 : index
    %c0_56 = arith.constant 0 : index
    %322 = vector.load %arg3[%c264, %c0_56] : memref<288x128xbf16, #tpu.memory_space<vmem>>, vector<8x128xbf16>
    %323 = arith.extf %322 : vector<8x128xbf16> to vector<8x128xf32>
    %324 = vector.shape_cast %321 : vector<2x128xf32> to vector<2x1x128xf32>
    %325 = vector.shape_cast %323 : vector<8x128xf32> to vector<1x8x128xf32>
    %326 = vector.broadcast %324 : vector<2x1x128xf32> to vector<2x8x128xf32>
    %327 = vector.broadcast %325 : vector<1x8x128xf32> to vector<2x8x128xf32>
    %328 = arith.mulf %326, %327 : vector<2x8x128xf32>
    %329 = arith.addf %320, %328 : vector<2x8x128xf32>
    %330 = vector.extract_strided_slice %266 {offsets = [0, 37], sizes = [2, 128], strides = [1, 1]} : vector<2x256xf32> to vector<2x128xf32>
    %c272 = arith.constant 272 : index
    %c0_57 = arith.constant 0 : index
    %331 = vector.load %arg3[%c272, %c0_57] : memref<288x128xbf16, #tpu.memory_space<vmem>>, vector<8x128xbf16>
    %332 = arith.extf %331 : vector<8x128xbf16> to vector<8x128xf32>
    %333 = vector.shape_cast %330 : vector<2x128xf32> to vector<2x1x128xf32>
    %334 = vector.shape_cast %332 : vector<8x128xf32> to vector<1x8x128xf32>
    %335 = vector.broadcast %333 : vector<2x1x128xf32> to vector<2x8x128xf32>
    %336 = vector.broadcast %334 : vector<1x8x128xf32> to vector<2x8x128xf32>
    %337 = arith.mulf %335, %336 : vector<2x8x128xf32>
    %338 = arith.addf %329, %337 : vector<2x8x128xf32>
    %339 = vector.extract_strided_slice %266 {offsets = [0, 38], sizes = [2, 128], strides = [1, 1]} : vector<2x256xf32> to vector<2x128xf32>
    %c280 = arith.constant 280 : index
    %c0_58 = arith.constant 0 : index
    %340 = vector.load %arg3[%c280, %c0_58] : memref<288x128xbf16, #tpu.memory_space<vmem>>, vector<8x128xbf16>
    %341 = arith.extf %340 : vector<8x128xbf16> to vector<8x128xf32>
    %342 = vector.shape_cast %339 : vector<2x128xf32> to vector<2x1x128xf32>
    %343 = vector.shape_cast %341 : vector<8x128xf32> to vector<1x8x128xf32>
    %344 = vector.broadcast %342 : vector<2x1x128xf32> to vector<2x8x128xf32>
    %345 = vector.broadcast %343 : vector<1x8x128xf32> to vector<2x8x128xf32>
    %346 = arith.mulf %344, %345 : vector<2x8x128xf32>
    %347 = arith.addf %338, %346 : vector<2x8x128xf32>
    %c0_59 = arith.constant 0 : index
    %c0_60 = arith.constant 0 : index
    %c0_61 = arith.constant 0 : index
    %348 = vector.load %arg5[%c0_59, %c0_60, %c0_61] : memref<2x8x128xf32, #tpu.memory_space<vmem>>, vector<2x8x128xf32>
    tpu.vector_store %arg5[%c0_59, %c0_60, %c0_61], %347 {strides = array<i32>} : memref<2x8x128xf32, #tpu.memory_space<vmem>>, vector<2x8x128xf32>,
    return
  }
  func.func @transform_0(%arg0: i32) -> (i32, i32, i32) {
    %c0_i32 = arith.constant 0 : i32
    %0 = arith.addi %arg0, %c0_i32 : i32
    %c0_i32_0 = arith.constant 0 : i32
    %c0_i32_1 = arith.constant 0 : i32
    %c0_i32_2 = arith.constant 0 : i32
    return %c0_i32_0, %c0_i32_1, %0 : i32, i32, i32
  }
  func.func @transform_1(%arg0: i32) -> (i32, i32, i32) {
    %c1_i32 = arith.constant 1 : i32
    %0 = arith.addi %arg0, %c1_i32 : i32
    %c0_i32 = arith.constant 0 : i32
    %c0_i32_0 = arith.constant 0 : i32
    %c0_i32_1 = arith.constant 0 : i32
    return %c0_i32, %c0_i32_0, %0 : i32, i32, i32
  }
  func.func @transform_2(%arg0: i32) -> (i32, i32) {
    %c0_i32 = arith.constant 0 : i32
    %c0_i32_0 = arith.constant 0 : i32
    return %c0_i32, %arg0 : i32, i32
  }
  func.func @transform_3(%arg0: i32) -> (i32, i32) {
    %c0_i32 = arith.constant 0 : i32
    %c0_i32_0 = arith.constant 0 : i32
    return %c0_i32, %arg0 : i32, i32
  }
  func.func @transform_4(%arg0: i32) -> (i32, i32, i32) {
    %c0_i32 = arith.constant 0 : i32
    %c0_i32_0 = arith.constant 0 : i32
    %c0_i32_1 = arith.constant 0 : i32
    return %c0_i32, %c0_i32_0, %arg0 : i32, i32, i32
  }
}

</mosaic_0001>

<llo_original>
// kernel: tpu_custom_call.1
$region0: #{tpu_custom_call.1}
  #allocation0 [shape = 'u32[]', space=smem, size = 0x4, offset = 0x4, fixed_abs, tag = 'smem constant byte address 0x4 - core index']
  #allocation1 [shape = 'u32[144,128]{1,0:T(1,128)}', space=vmem, size = 0x12000, scoped, tag = 'internal scratch']
  %s0 = inlined_call_operand.hbm [shape: f32[2,4,512], index: 0, kind: input, shape index: {}]
  %s1 = inlined_call_operand.hbm [shape: f32[2,4,512], index: 1, kind: input, shape index: {}]
  %s2 = inlined_call_operand.hbm [shape: bf16[288,384], index: 2, kind: input, shape index: {}]
  %s3 = inlined_call_operand.hbm [shape: f32[8,384], index: 3, kind: input, shape index: {}]
  %s4 = inlined_call_operand.hbm [shape: f32[2,8,384], index: 4, kind: output, shape index: {}]
  %s5 = sld [smem:[#allocation0]]
  $region65: #{tpu_custom_call.1} parent=0
    _
  %s7 = ssub.s32 1, %s5
  %s8 = scalar_select 0, %s7, %s5
  $region1: #{tpu_custom_call.1} parent=0
    #allocation2 [shape = 'u8[8192]{0}', space=vmem, size = 0x2000, scoped, tag = 'input window, operand 0']
    #allocation3 [shape = 's32[2]{0}', space=sflag, size = 0x8, scoped, tag = 'scoped memory for tpu_custom_call.1']
    #allocation4 [shape = 's32[2]{0}', space=sflag, size = 0x8, scoped, tag = 'scoped memory for tpu_custom_call.1']
    #allocation5 [shape = 'u8[8192]{0}', space=vmem, size = 0x2000, scoped, tag = 'input window, operand 1']
    #allocation6 [shape = 's32[2]{0}', space=sflag, size = 0x8, scoped, tag = 'scoped memory for tpu_custom_call.1']
    #allocation7 [shape = 'u8[147456]{0}', space=vmem, size = 0x24000, scoped, tag = 'input window, operand 2']
    #allocation8 [shape = 'u8[8192]{0}', space=vmem, size = 0x2000, scoped, tag = 'input window, operand 3']
    #allocation9 [shape = 's32[2]{0}', space=sflag, size = 0x8, scoped, tag = 'scoped memory for tpu_custom_call.1']
    #allocation10 [shape = 'u8[16384]{0}', space=vmem, size = 0x4000, scoped, tag = 'output window, operand 0']
    %9 = vsyncpa [#allocation3], 0
    %s10 = scalar_lea.sflag [#allocation3], 1
    %11 = vsyncpa %s10, 0
    %12 = vsyncpa [#allocation6], 0
    %s13 = scalar_lea.sflag [#allocation6], 1
    %14 = vsyncpa %s13, 0
    %15 = vsyncpa [#allocation9], 0
    %s16 = scalar_lea.sflag [#allocation9], 1
    %17 = vsyncpa %s16, 0
    %18 = vsyncpa [#allocation4], 0
    %s19 = scalar_lea.sflag [#allocation4], 1
    %20 = vsyncpa %s19, 0
    loop: start=0, step=1, limit=5
    $region2: #{tpu_custom_call.1} parent=1 // loop_pre_header
      _
    $region3: #{tpu_custom_call.1} parent=1 // loop_header
      %s22 = sphi 0, %s26
      %p23 = scmp.ge.s32.totalorder %s22, 5
      %s32 = sphi 0, %s34
      %s35 = sphi 0, %s32
      %s36 = sphi 0, %s35
      %s52 = sphi 0, %s36
      %s60 = sphi 0, %s62
      %s63 = sphi 0, %s60
      %s64 = sphi 0, %s63
      %s80 = sphi 0, %s64
      %s86 = sphi 0, %s88
      %s89 = sphi 0, %s86
      %s90 = sphi 0, %s89
      %s106 = sphi 0, %s90
      %s112 = sphi 0, %s114
      %s115 = sphi 0, %s112
      %s116 = sphi 0, %s115
      %s132 = sphi 0, %s116
      %s138 = sphi 0, %s140
      %s141 = sphi 0, %s138
      %s142 = sphi 0, %s141
      %s158 = sphi 0, %s142
    $region4: #{tpu_custom_call.1} parent=1 // loop_header_branch
      %25 = sbr.rel (%p23) target = $region8
    $region5: #{tpu_custom_call.1} parent=1 // loop_body
      %s27 = ssub.s32 %s22, 1
      %s28 = ssub.s32 %s22, 2
      %s29 = sadd.s32 %s22, 1
      %s30 = ssub.s32 %s22, %s29
      %p31 = scmp.eq.s32.totalorder %s30, 0
      %s33 = sadd.s32 %s32, 1
      %s34 = scalar_select %p31, %s32, %s33
      %p37 = pneg %p31
      %p38 = scmp.eq.s32.totalorder %s22, 2
      %p39 = por %p37, %p38
      %p40 = scmp.ne.s32.totalorder %s32, %s35
      %p41 = scmp.eq.s32.totalorder %s22, 0
      %p42 = por %p40, %p41
      %p43 = scmp.ne.s32.totalorder %s32, %s35
      %p44 = scmp.eq.s32.totalorder %s27, 2
      %p45 = por %p43, %p44
      %p46 = scmp.ne.s32.totalorder %s35, %s36
      %p47 = scmp.eq.s32.totalorder %s27, 0
      %p48 = por %p46, %p47
      %p49 = scmp.ne.s32.totalorder %s35, %s36
      %p50 = scmp.eq.s32.totalorder %s28, 2
      %p51 = por %p49, %p50
      %p53 = scmp.ne.s32.totalorder %s36, %s52
      %p54 = scmp.eq.s32.totalorder %s28, 0
      %p55 = por %p53, %p54
      %s56 = sadd.s32 %s22, 1
      %s57 = sadd.s32 %s29, 1
      %s58 = ssub.s32 %s56, %s57
      %p59 = scmp.eq.s32.totalorder %s58, 0
      %s61 = sadd.s32 %s60, 1
      %s62 = scalar_select %p59, %s60, %s61
      %p65 = pneg %p59
      %p66 = scmp.eq.s32.totalorder %s22, 2
      %p67 = por %p65, %p66
      %p68 = scmp.ne.s32.totalorder %s60, %s63
      %p69 = scmp.eq.s32.totalorder %s22, 0
      %p70 = por %p68, %p69
      %p71 = scmp.ne.s32.totalorder %s60, %s63
      %p72 = scmp.eq.s32.totalorder %s27, 2
      %p73 = por %p71, %p72
      %p74 = scmp.ne.s32.totalorder %s63, %s64
      %p75 = scmp.eq.s32.totalorder %s27, 0
      %p76 = por %p74, %p75
      %p77 = scmp.ne.s32.totalorder %s63, %s64
      %p78 = scmp.eq.s32.totalorder %s28, 2
      %p79 = por %p77, %p78
      %p81 = scmp.ne.s32.totalorder %s64, %s80
      %p82 = scmp.eq.s32.totalorder %s28, 0
      %p83 = por %p81, %p82
      %s84 = ssub.s32 %s22, %s29
      %p85 = scmp.eq.s32.totalorder %s84, 0
      %s87 = sadd.s32 %s86, 1
      %s88 = scalar_select %p85, %s86, %s87
      %p91 = pneg %p85
      %p92 = scmp.eq.s32.totalorder %s22, 2
      %p93 = por %p91, %p92
      %p94 = scmp.ne.s32.totalorder %s86, %s89
      %p95 = scmp.eq.s32.totalorder %s22, 0
      %p96 = por %p94, %p95
      %p97 = scmp.ne.s32.totalorder %s86, %s89
      %p98 = scmp.eq.s32.totalorder %s27, 2
      %p99 = por %p97, %p98
      %p100 = scmp.ne.s32.totalorder %s89, %s90
      %p101 = scmp.eq.s32.totalorder %s27, 0
      %p102 = por %p100, %p101
      %p103 = scmp.ne.s32.totalorder %s89, %s90
      %p104 = scmp.eq.s32.totalorder %s28, 2
      %p105 = por %p103, %p104
      %p107 = scmp.ne.s32.totalorder %s90, %s106
      %p108 = scmp.eq.s32.totalorder %s28, 0
      %p109 = por %p107, %p108
      %s110 = ssub.s32 %s22, %s29
      %p111 = scmp.eq.s32.totalorder %s110, 0
      %s113 = sadd.s32 %s112, 1
      %s114 = scalar_select %p111, %s112, %s113
      %p117 = pneg %p111
      %p118 = scmp.eq.s32.totalorder %s22, 2
      %p119 = por %p117, %p118
      %p120 = scmp.ne.s32.totalorder %s112, %s115
      %p121 = scmp.eq.s32.totalorder %s22, 0
      %p122 = por %p120, %p121
      %p123 = scmp.ne.s32.totalorder %s112, %s115
      %p124 = scmp.eq.s32.totalorder %s27, 2
      %p125 = por %p123, %p124
      %p126 = scmp.ne.s32.totalorder %s115, %s116
      %p127 = scmp.eq.s32.totalorder %s27, 0
      %p128 = por %p126, %p127
      %p129 = scmp.ne.s32.totalorder %s115, %s116
      %p130 = scmp.eq.s32.totalorder %s28, 2
      %p131 = por %p129, %p130
      %p133 = scmp.ne.s32.totalorder %s116, %s132
      %p134 = scmp.eq.s32.totalorder %s28, 0
      %p135 = por %p133, %p134
      %s136 = ssub.s32 %s22, %s29
      %p137 = scmp.eq.s32.totalorder %s136, 0
      %s139 = sadd.s32 %s138, 1
      %s140 = scalar_select %p137, %s138, %s139
      %p143 = pneg %p137
      %p144 = scmp.eq.s32.totalorder %s22, 2
      %p145 = por %p143, %p144
      %p146 = scmp.ne.s32.totalorder %s138, %s141
      %p147 = scmp.eq.s32.totalorder %s22, 0
      %p148 = por %p146, %p147
      %p149 = scmp.ne.s32.totalorder %s138, %s141
      %p150 = scmp.eq.s32.totalorder %s27, 2
      %p151 = por %p149, %p150
      %p152 = scmp.ne.s32.totalorder %s141, %s142
      %p153 = scmp.eq.s32.totalorder %s27, 0
      %p154 = por %p152, %p153
      %p155 = scmp.ne.s32.totalorder %s141, %s142
      %p156 = scmp.eq.s32.totalorder %s28, 2
      %p157 = por %p155, %p156
      %p159 = scmp.ne.s32.totalorder %s142, %s158
      %p160 = scmp.eq.s32.totalorder %s28, 0
      %p161 = por %p159, %p160
      %p162 = scmp.le.s32.totalorder 1, %s22
      %p163 = scmp.lt.s32.totalorder %s22, 4
      %p164 = pnand %p162, %p163
      %p165 = pneg %p164
      // Predicated region
      $region9: #{tpu_custom_call.1} parent=5 // pred_check
        _
      $region10: #{tpu_custom_call.1} parent=5 // pred_check_branch
        %167 = sbr.rel (%p164) target = $region12
      $region11: #{tpu_custom_call.1} parent=5 // pred_region
        %s168 = ssub.s32 %s22, 1
      $region12: #{tpu_custom_call.1} parent=5 // pred_fallthru
        _
      %p169 = scmp.lt.s32.totalorder %s22, 3
      // Predicated region
      $region13: #{tpu_custom_call.1} parent=5 // pred_check
        %p170 = pneg %p169
      $region14: #{tpu_custom_call.1} parent=5 // pred_check_branch
        %172 = sbr.rel (%p170) target = $region16
      $region15: #{tpu_custom_call.1} parent=5 // pred_region
        // Predicated region
        $region17: #{tpu_custom_call.1} parent=15 // pred_check
          %p173 = pneg %p42
        $region18: #{tpu_custom_call.1} parent=15 // pred_check_branch
          %175 = sbr.rel (%p173) target = $region20
        $region19: #{tpu_custom_call.1} parent=15 // pred_region
          %s176 = sand.u32 %s32, 1
          %s177 = scalar_lea.sflag [#allocation3], %s176
          %s178 = sand.u32 %s32, 1
          %s179 = smul.addr %s178, 8
          %s180 = scalar_lea.vmem [#allocation2], %s179
          %s182 = ssub.s32 128, 128
          %183 = vsyncadd %s177, %s182
          %s184 = smul.addr %s22, 64
          %s185 = scalar_lea.hbm %s0, %s184
          %s186 = sshll.u32 %s180, 4
          %s187 = int_to_ptr.vmem [resolvable:$true] %s186
          %192 = dma.hbm_to_vmem [thread:$0]  %s185, 128, %s187, %s177, 256, 64, 4
        $region20: #{tpu_custom_call.1} parent=15 // pred_fallthru
          _
        // Predicated region
        $region21: #{tpu_custom_call.1} parent=15 // pred_check
          %p193 = pneg %p70
        $region22: #{tpu_custom_call.1} parent=15 // pred_check_branch
          %195 = sbr.rel (%p193) target = $region24
        $region23: #{tpu_custom_call.1} parent=15 // pred_region
          %s196 = sand.u32 %s22, 1
          %s197 = scalar_lea.sflag [#allocation6], %s196
          %s198 = sand.u32 %s60, 1
          %s199 = smul.addr %s198, 8
          %s200 = scalar_lea.vmem [#allocation5], %s199
          %s201 = sadd.s32 %s22, 1
          %s203 = ssub.s32 128, 128
          %204 = vsyncadd %s197, %s203
          %s205 = smul.addr %s201, 64
          %s206 = scalar_lea.hbm %s1, %s205
          %s207 = sshll.u32 %s200, 4
          %s208 = int_to_ptr.vmem [resolvable:$true] %s207
          %213 = dma.hbm_to_vmem [thread:$0]  %s206, 128, %s208, %s197, 256, 64, 4
        $region24: #{tpu_custom_call.1} parent=15 // pred_fallthru
          _
        // Predicated region
        $region25: #{tpu_custom_call.1} parent=15 // pred_check
          %p214 = pneg %p96
        $region26: #{tpu_custom_call.1} parent=15 // pred_check_branch
          %216 = sbr.rel (%p214) target = $region28
        $region27: #{tpu_custom_call.1} parent=15 // pred_region
          %s217 = sand.u32 %s22, 1
          %s218 = scalar_lea.sflag [#allocation6], %s217
          %s219 = sand.u32 %s86, 1
          %s220 = smul.addr %s219, 144
          %s221 = scalar_lea.vmem [#allocation7], %s220
          %s223 = ssub.s32 2304, 2304
          %224 = vsyncadd %s218, %s223
          %s225 = smul.addr %s22, 64
          %s226 = scalar_lea.hbm %s2, %s225
          %s227 = sshll.u32 %s221, 4
          %s228 = int_to_ptr.vmem [resolvable:$true] %s227
          %233 = dma.hbm_to_vmem [thread:$0]  %s226, 2304, %s228, %s218, 192, 64, 4
        $region28: #{tpu_custom_call.1} parent=15 // pred_fallthru
          _
        // Predicated region
        $region29: #{tpu_custom_call.1} parent=15 // pred_check
          %p234 = pneg %p122
        $region30: #{tpu_custom_call.1} parent=15 // pred_check_branch
          %236 = sbr.rel (%p234) target = $region32
        $region31: #{tpu_custom_call.1} parent=15 // pred_region
          %s237 = sand.u32 %s112, 1
          %s238 = scalar_lea.sflag [#allocation9], %s237
          %s239 = sand.u32 %s112, 1
          %s240 = smul.addr %s239, 8
          %s241 = scalar_lea.vmem [#allocation8], %s240
          %s243 = ssub.s32 128, 128
          %244 = vsyncadd %s238, %s243
          %s245 = smul.addr %s22, 128
          %s246 = scalar_lea.hbm %s3, %s245
          %s248 = sshll.u32 %s241, 4
          %s249 = int_to_ptr.vmem [resolvable:$true] %s248
          %251 = dma.hbm_to_vmem [thread:$0]  %s246, 128, %s249, %s238
        $region32: #{tpu_custom_call.1} parent=15 // pred_fallthru
          _
      $region16: #{tpu_custom_call.1} parent=5 // pred_fallthru
        _
      %p252 = scmp.le.s32.totalorder 1, %s22
      %p253 = scmp.lt.s32.totalorder %s22, 4
      %p254 = pnand %p252, %p253
      %p255 = pneg %p254
      // Predicated region
      $region33: #{tpu_custom_call.1} parent=5 // pred_check
        _
      $region34: #{tpu_custom_call.1} parent=5 // pred_check_branch
        %257 = sbr.rel (%p254) target = $region36
      $region35: #{tpu_custom_call.1} parent=5 // pred_region
        %s258 = ssub.s32 %s22, 1
        %s259 = sand.u32 %s35, 1
        %s260 = scalar_lea.sflag [#allocation3], %s259
        %s261 = sand.u32 %s35, 1
        %s262 = smul.addr %s261, 8
        %s263 = scalar_lea.vmem [#allocation2], %s262
        // Predicated region
        $region37: #{tpu_custom_call.1} parent=35 // pred_check
          %p264 = pneg %p48
        $region38: #{tpu_custom_call.1} parent=35 // pred_check_branch
          %266 = sbr.rel (%p264) target = $region40
        $region39: #{tpu_custom_call.1} parent=35 // pred_region
          %267 = dma.done %s260, 128
        $region40: #{tpu_custom_call.1} parent=35 // pred_fallthru
          _
        %s268 = sand.u32 %s27, 1
        %s269 = scalar_lea.sflag [#allocation6], %s268
        %s270 = sand.u32 %s63, 1
        %s271 = smul.addr %s270, 8
        %s272 = scalar_lea.vmem [#allocation5], %s271
        // Predicated region
        $region41: #{tpu_custom_call.1} parent=35 // pred_check
          %p273 = pneg %p76
        $region42: #{tpu_custom_call.1} parent=35 // pred_check_branch
          %275 = sbr.rel (%p273) target = $region44
        $region43: #{tpu_custom_call.1} parent=35 // pred_region
          %276 = dma.done %s269, 128
        $region44: #{tpu_custom_call.1} parent=35 // pred_fallthru
          _
        %s277 = sand.u32 %s27, 1
        %s278 = scalar_lea.sflag [#allocation6], %s277
        %s279 = sand.u32 %s89, 1
        %s280 = smul.addr %s279, 144
        %s281 = scalar_lea.vmem [#allocation7], %s280
        // Predicated region
        $region45: #{tpu_custom_call.1} parent=35 // pred_check
          %p282 = pneg %p102
        $region46: #{tpu_custom_call.1} parent=35 // pred_check_branch
          %284 = sbr.rel (%p282) target = $region48
        $region47: #{tpu_custom_call.1} parent=35 // pred_region
          %285 = dma.done %s278, 2304
        $region48: #{tpu_custom_call.1} parent=35 // pred_fallthru
          _
        %s286 = sand.u32 %s115, 1
        %s287 = scalar_lea.sflag [#allocation9], %s286
        %s288 = sand.u32 %s115, 1
        %s289 = smul.addr %s288, 8
        %s290 = scalar_lea.vmem [#allocation8], %s289
        // Predicated region
        $region49: #{tpu_custom_call.1} parent=35 // pred_check
          %p291 = pneg %p128
        $region50: #{tpu_custom_call.1} parent=35 // pred_check_branch
          %293 = sbr.rel (%p291) target = $region52
        $region51: #{tpu_custom_call.1} parent=35 // pred_region
          %294 = dma.done %s287, 128
        $region52: #{tpu_custom_call.1} parent=35 // pred_fallthru
          _
        %s295 = sand.u32 %s35, 1
        %s296 = scalar_lea.sflag [#allocation3], %s295
        %s297 = sand.u32 %s35, 1
        %s298 = smul.addr %s297, 8
        %s299 = scalar_lea.vmem [#allocation2], %s298
        %p300 = pneg %p48
        %p301 = pneg %p45
        %s302 = sand.u32 %s27, 1
        %s303 = scalar_lea.sflag [#allocation6], %s302
        %s304 = sand.u32 %s63, 1
        %s305 = smul.addr %s304, 8
        %s306 = scalar_lea.vmem [#allocation5], %s305
        %p307 = pneg %p76
        %p308 = pneg %p73
        %s309 = sand.u32 %s27, 1
        %s310 = scalar_lea.sflag [#allocation6], %s309
        %s311 = sand.u32 %s89, 1
        %s312 = smul.addr %s311, 144
        %s313 = scalar_lea.vmem [#allocation7], %s312
        %p314 = pneg %p102
        %p315 = pneg %p99
        %s316 = sand.u32 %s115, 1
        %s317 = scalar_lea.sflag [#allocation9], %s316
        %s318 = sand.u32 %s115, 1
        %s319 = smul.addr %s318, 8
        %s320 = scalar_lea.vmem [#allocation8], %s319
        %p321 = pneg %p128
        %p322 = pneg %p125
        %p323 = pneg %p154
        %p324 = pneg %p151
        %s325 = sand.u32 %s141, 1
        %s326 = scalar_lea.sflag [#allocation4], %s325
        %s327 = sand.u32 %s141, 1
        %s328 = smul.addr %s327, 16
        %s329 = scalar_lea.vmem [#allocation10], %s328
        %s330 = sadd.s32 %s27, 1
        %v331 = vld [vmem:[%s290] sm:$0xff]
        %v332 = vld [vmem:[%s263] sm:$0x1]
        %v333 = vld [vmem:[%s263 + $0x4] sm:$0x1]
        %v334 = vld [vmem:[%s272] sm:$0x1]
        %v335 = vld [vmem:[%s272 + $0x4] sm:$0x1]
        %v338 = vrot.slane %v333, 7
        %vm339 = vcmask 1041409
        %v340 = vsel %vm339, %v338, %v332
        %v343 = vrot.slane %v335, 7
        %v344 = vsel %vm339, %v343, %v334
        %v345 = vld [vmem:[%s281] sm:$0xf]
        %v346 = vunpack.c.l.bf16 %v345
        %v348 = vunpack.c.l.s4 1966171168
        %v349 = vunpack.c.0.s8 %v348
        %v350 = vlaneseq
        %v351 = vshrl.u32 %v350, 7
        %v352 = vsub.s32 %v349, %v351
        %v353 = vrot.slane %v340, %v352
        %v354 = vcombine.high %v353, %v353
        %v356 = vunpack.c.l.s4 1966171168
        %v357 = vunpack.c.0.s8 %v356
        %v358 = vlaneseq
        %v359 = vshrl.u32 %v358, 7
        %v360 = vsub.s32 %v357, %v359
        %v361 = vrot.slane %v353, %v360
        %v363 = vunpack.c.l.s4 1966171168
        %v364 = vunpack.c.0.s8 %v363
        %v365 = vlaneseq
        %v366 = vshrl.u32 %v365, 7
        %v367 = vsub.s32 %v364, %v366
        %v368 = vrot.slane %v354, %v367
        %v369 = vlaneseq
        %v370 = vshrl.u32 %v369, 7
        %v371 = vsub.s32 0, %v370
        %v372 = vrot.slane %v361, %v371
        %v373 = vlaneseq
        %v374 = vshrl.u32 %v373, 7
        %v375 = vsub.s32 0, %v374
        %v376 = vrot.slane %v368, %v375
        %v379 = vmul.f32 %v372, %v346
        %v380 = vmul.f32 %v376, %v346
        %v381 = vadd.f32 %v331, %v379
        %v382 = vadd.f32 %v331, %v380
        %v383 = vld [vmem:[%s281 + $0x4] sm:$0xf]
        %v384 = vunpack.c.l.bf16 %v383
        %v385 = vcombine.low %v340, %v344
        %v387 = vunpack.c.l.s4 1966171168
        %v388 = vunpack.c.0.s8 %v387
        %v389 = vlaneseq
        %v390 = vshrl.u32 %v389, 7
        %v391 = vsub.s32 %v388, %v390
        %v392 = vrot.slane %v385, %v391
        %v393 = vcombine.high %v392, %v392
        %v395 = vunpack.c.l.s4 1966171168
        %v396 = vunpack.c.0.s8 %v395
        %v397 = vlaneseq
        %v398 = vshrl.u32 %v397, 7
        %v399 = vsub.s32 %v396, %v398
        %v400 = vrot.slane %v392, %v399
        %v402 = vunpack.c.l.s4 1966171168
        %v403 = vunpack.c.0.s8 %v402
        %v404 = vlaneseq
        %v405 = vshrl.u32 %v404, 7
        %v406 = vsub.s32 %v403, %v405
        %v407 = vrot.slane %v393, %v406
        %v408 = vlaneseq
        %v409 = vshrl.u32 %v408, 7
        %v410 = vsub.s32 0, %v409
        %v411 = vrot.slane %v400, %v410
        %v412 = vlaneseq
        %v413 = vshrl.u32 %v412, 7
        %v414 = vsub.s32 1, %v413
        %v415 = vrot.slane %v400, %v414
        %v416 = vlaneseq
        %v417 = vshrl.u32 %v416, 7
        %v418 = vsub.s32 0, %v417
        %v419 = vrot.slane %v407, %v418
        %v420 = vlaneseq
        %v421 = vshrl.u32 %v420, 7
        %v422 = vsub.s32 1, %v421
        %v423 = vrot.slane %v407, %v422
        %429 = vrot.lane.b32.xlu0 %v384, 1
        %v430 = vpop.permute.xlu0 %429
        %v432 = vmul.f32 %v411, %v430
        %v433 = vmul.f32 %v415, %v430
        %v434 = vmul.f32 %v419, %v430
        %v435 = vmul.f32 %v423, %v430
        %440 = vrot.lane.b32.xlu0 %v432, 127
        %v441 = vpop.permute.xlu0 %440
        %442 = vrot.lane.b32.xlu0 %v433, 127
        %v443 = vpop.permute.xlu0 %442
        %444 = vrot.lane.b32.xlu0 %v434, 127
        %v445 = vpop.permute.xlu0 %444
        %446 = vrot.lane.b32.xlu0 %v435, 127
        %v447 = vpop.permute.xlu0 %446
        %vm448 = vcmask 1039360
        %v449 = vsel %vm448, %v441, %v443
        %v450 = vsel %vm448, %v445, %v447
        %v453 = vadd.f32 %v381, %v449
        %v454 = vadd.f32 %v382, %v450
        %v455 = vld [vmem:[%s281 + $0x8] sm:$0xf]
        %v456 = vunpack.c.l.bf16 %v455
        %458 = vrot.lane.b32.xlu0 %v456, 2
        %v459 = vpop.permute.xlu0 %458
        %v461 = vmul.f32 %v411, %v459
        %v462 = vmul.f32 %v415, %v459
        %v463 = vmul.f32 %v419, %v459
        %v464 = vmul.f32 %v423, %v459
        %469 = vrot.lane.b32.xlu0 %v461, 126
        %v470 = vpop.permute.xlu0 %469
        %471 = vrot.lane.b32.xlu0 %v462, 126
        %v472 = vpop.permute.xlu0 %471
        %473 = vrot.lane.b32.xlu0 %v463, 126
        %v474 = vpop.permute.xlu0 %473
        %475 = vrot.lane.b32.xlu0 %v464, 126
        %v476 = vpop.permute.xlu0 %475
        %vm477 = vcmask 1031168
        %v478 = vsel %vm477, %v470, %v472
        %v479 = vsel %vm477, %v474, %v476
        %v482 = vadd.f32 %v453, %v478
        %v483 = vadd.f32 %v454, %v479
        %v484 = vld [vmem:[%s281 + $0xc] sm:$0xf]
        %v485 = vunpack.c.l.bf16 %v484
        %487 = vrot.lane.b32.xlu0 %v485, 18
        %v488 = vpop.permute.xlu0 %487
        %v490 = vmul.f32 %v411, %v488
        %v491 = vmul.f32 %v415, %v488
        %v492 = vmul.f32 %v419, %v488
        %v493 = vmul.f32 %v423, %v488
        %498 = vrot.lane.b32.xlu0 %v490, 110
        %v499 = vpop.permute.xlu0 %498
        %500 = vrot.lane.b32.xlu0 %v491, 110
        %v501 = vpop.permute.xlu0 %500
        %502 = vrot.lane.b32.xlu0 %v492, 110
        %v503 = vpop.permute.xlu0 %502
        %504 = vrot.lane.b32.xlu0 %v493, 110
        %v505 = vpop.permute.xlu0 %504
        %vm506 = vcmask 900096
        %v507 = vsel %vm506, %v499, %v501
        %v508 = vsel %vm506, %v503, %v505
        %v511 = vadd.f32 %v482, %v507
        %v512 = vadd.f32 %v483, %v508
        %v513 = vld [vmem:[%s281 + $0x10] sm:$0xf]
        %v514 = vunpack.c.l.bf16 %v513
        %516 = vrot.lane.b32.xlu0 %v514, 19
        %v517 = vpop.permute.xlu0 %516
        %v519 = vmul.f32 %v411, %v517
        %v520 = vmul.f32 %v415, %v517
        %v521 = vmul.f32 %v419, %v517
        %v522 = vmul.f32 %v423, %v517
        %527 = vrot.lane.b32.xlu0 %v519, 109
        %v528 = vpop.permute.xlu0 %527
        %529 = vrot.lane.b32.xlu0 %v520, 109
        %v530 = vpop.permute.xlu0 %529
        %531 = vrot.lane.b32.xlu0 %v521, 109
        %v532 = vpop.permute.xlu0 %531
        %533 = vrot.lane.b32.xlu0 %v522, 109
        %v534 = vpop.permute.xlu0 %533
        %vm535 = vcmask 891904
        %v536 = vsel %vm535, %v528, %v530
        %v537 = vsel %vm535, %v532, %v534
        %v540 = vadd.f32 %v511, %v536
        %v541 = vadd.f32 %v512, %v537
        %v542 = vld [vmem:[%s281 + $0x14] sm:$0xf]
        %v543 = vunpack.c.l.bf16 %v542
        %545 = vrot.lane.b32.xlu0 %v543, 20
        %v546 = vpop.permute.xlu0 %545
        %v548 = vmul.f32 %v411, %v546
        %v549 = vmul.f32 %v415, %v546
        %v550 = vmul.f32 %v419, %v546
        %v551 = vmul.f32 %v423, %v546
        %556 = vrot.lane.b32.xlu0 %v548, 108
        %v557 = vpop.permute.xlu0 %556
        %558 = vrot.lane.b32.xlu0 %v549, 108
        %v559 = vpop.permute.xlu0 %558
        %560 = vrot.lane.b32.xlu0 %v550, 108
        %v561 = vpop.permute.xlu0 %560
        %562 = vrot.lane.b32.xlu0 %v551, 108
        %v563 = vpop.permute.xlu0 %562
        %vm564 = vcmask 883712
        %v565 = vsel %vm564, %v557, %v559
        %v566 = vsel %vm564, %v561, %v563
        %v569 = vadd.f32 %v540, %v565
        %v570 = vadd.f32 %v541, %v566
        %v571 = vld [vmem:[%s281 + $0x18] sm:$0xf]
        %v572 = vunpack.c.l.bf16 %v571
        %574 = vrot.lane.b32.xlu0 %v572, 36
        %v575 = vpop.permute.xlu0 %574
        %v577 = vmul.f32 %v411, %v575
        %v578 = vmul.f32 %v415, %v575
        %v579 = vmul.f32 %v419, %v575
        %v580 = vmul.f32 %v423, %v575
        %585 = vrot.lane.b32.xlu0 %v577, 92
        %v586 = vpop.permute.xlu0 %585
        %587 = vrot.lane.b32.xlu0 %v578, 92
        %v588 = vpop.permute.xlu0 %587
        %589 = vrot.lane.b32.xlu0 %v579, 92
        %v590 = vpop.permute.xlu0 %589
        %591 = vrot.lane.b32.xlu0 %v580, 92
        %v592 = vpop.permute.xlu0 %591
        %vm593 = vcmask 752640
        %v594 = vsel %vm593, %v586, %v588
        %v595 = vsel %vm593, %v590, %v592
        %v598 = vadd.f32 %v569, %v594
        %v599 = vadd.f32 %v570, %v595
        %v600 = vld [vmem:[%s281 + $0x1c] sm:$0xf]
        %v601 = vunpack.c.l.bf16 %v600
        %603 = vrot.lane.b32.xlu0 %v601, 37
        %v604 = vpop.permute.xlu0 %603
        %v606 = vmul.f32 %v411, %v604
        %v607 = vmul.f32 %v415, %v604
        %v608 = vmul.f32 %v419, %v604
        %v609 = vmul.f32 %v423, %v604
        %614 = vrot.lane.b32.xlu0 %v606, 91
        %v615 = vpop.permute.xlu0 %614
        %616 = vrot.lane.b32.xlu0 %v607, 91
        %v617 = vpop.permute.xlu0 %616
        %618 = vrot.lane.b32.xlu0 %v608, 91
        %v619 = vpop.permute.xlu0 %618
        %620 = vrot.lane.b32.xlu0 %v609, 91
        %v621 = vpop.permute.xlu0 %620
        %vm622 = vcmask 744448
        %v623 = vsel %vm622, %v615, %v617
        %v624 = vsel %vm622, %v619, %v621
        %v627 = vadd.f32 %v598, %v623
        %v628 = vadd.f32 %v599, %v624
        %v629 = vld [vmem:[%s281 + $0x20] sm:$0xf]
        %v630 = vunpack.c.l.bf16 %v629
        %632 = vrot.lane.b32.xlu0 %v630, 38
        %v633 = vpop.permute.xlu0 %632
        %v635 = vmul.f32 %v411, %v633
        %v636 = vmul.f32 %v415, %v633
        %v637 = vmul.f32 %v419, %v633
        %v638 = vmul.f32 %v423, %v633
        %643 = vrot.lane.b32.xlu0 %v635, 90
        %v644 = vpop.permute.xlu0 %643
        %645 = vrot.lane.b32.xlu0 %v636, 90
        %v646 = vpop.permute.xlu0 %645
        %647 = vrot.lane.b32.xlu0 %v637, 90
        %v648 = vpop.permute.xlu0 %647
        %649 = vrot.lane.b32.xlu0 %v638, 90
        %v650 = vpop.permute.xlu0 %649
        %vm651 = vcmask 736256
        %v652 = vsel %vm651, %v644, %v646
        %v653 = vsel %vm651, %v648, %v650
        %v656 = vadd.f32 %v627, %v652
        %v657 = vadd.f32 %v628, %v653
        %v658 = vld [vmem:[%s263 + $0x1] sm:$0x1]
        %v659 = vld [vmem:[%s263 + $0x5] sm:$0x1]
        %v660 = vld [vmem:[%s272 + $0x1] sm:$0x1]
        %v661 = vld [vmem:[%s272 + $0x5] sm:$0x1]
        %v664 = vrot.slane %v659, 7
        %v665 = vsel %vm339, %v664, %v658
        %v668 = vrot.slane %v661, 7
        %v669 = vsel %vm339, %v668, %v660
        %v670 = vld [vmem:[%s281 + $0x24] sm:$0xf]
        %v671 = vunpack.c.l.bf16 %v670
        %v673 = vunpack.c.l.s4 1966171168
        %v674 = vunpack.c.0.s8 %v673
        %v675 = vlaneseq
        %v676 = vshrl.u32 %v675, 7
        %v677 = vsub.s32 %v674, %v676
        %v678 = vrot.slane %v665, %v677
        %v679 = vcombine.high %v678, %v678
        %v681 = vunpack.c.l.s4 1966171168
        %v682 = vunpack.c.0.s8 %v681
        %v683 = vlaneseq
        %v684 = vshrl.u32 %v683, 7
        %v685 = vsub.s32 %v682, %v684
        %v686 = vrot.slane %v678, %v685
        %v688 = vunpack.c.l.s4 1966171168
        %v689 = vunpack.c.0.s8 %v688
        %v690 = vlaneseq
        %v691 = vshrl.u32 %v690, 7
        %v692 = vsub.s32 %v689, %v691
        %v693 = vrot.slane %v679, %v692
        %v694 = vlaneseq
        %v695 = vshrl.u32 %v694, 7
        %v696 = vsub.s32 0, %v695
        %v697 = vrot.slane %v686, %v696
        %v698 = vlaneseq
        %v699 = vshrl.u32 %v698, 7
        %v700 = vsub.s32 0, %v699
        %v701 = vrot.slane %v693, %v700
        %v704 = vmul.f32 %v697, %v671
        %v705 = vmul.f32 %v701, %v671
        %v706 = vadd.f32 %v656, %v704
        %v707 = vadd.f32 %v657, %v705
        %v708 = vld [vmem:[%s281 + $0x28] sm:$0xf]
        %v709 = vunpack.c.l.bf16 %v708
        %v710 = vcombine.low %v665, %v669
        %v712 = vunpack.c.l.s4 1966171168
        %v713 = vunpack.c.0.s8 %v712
        %v714 = vlaneseq
        %v715 = vshrl.u32 %v714, 7
        %v716 = vsub.s32 %v713, %v715
        %v717 = vrot.slane %v710, %v716
        %v718 = vcombine.high %v717, %v717
        %v720 = vunpack.c.l.s4 1966171168
        %v721 = vunpack.c.0.s8 %v720
        %v722 = vlaneseq
        %v723 = vshrl.u32 %v722, 7
        %v724 = vsub.s32 %v721, %v723
        %v725 = vrot.slane %v717, %v724
        %v727 = vunpack.c.l.s4 1966171168
        %v728 = vunpack.c.0.s8 %v727
        %v729 = vlaneseq
        %v730 = vshrl.u32 %v729, 7
        %v731 = vsub.s32 %v728, %v730
        %v732 = vrot.slane %v718, %v731
        %v733 = vlaneseq
        %v734 = vshrl.u32 %v733, 7
        %v735 = vsub.s32 0, %v734
        %v736 = vrot.slane %v725, %v735
        %v737 = vlaneseq
        %v738 = vshrl.u32 %v737, 7
        %v739 = vsub.s32 1, %v738
        %v740 = vrot.slane %v725, %v739
        %v741 = vlaneseq
        %v742 = vshrl.u32 %v741, 7
        %v743 = vsub.s32 0, %v742
        %v744 = vrot.slane %v732, %v743
        %v745 = vlaneseq
        %v746 = vshrl.u32 %v745, 7
        %v747 = vsub.s32 1, %v746
        %v748 = vrot.slane %v732, %v747
        %754 = vrot.lane.b32.xlu0 %v709, 1
        %v755 = vpop.permute.xlu0 %754
        %v757 = vmul.f32 %v736, %v755
        %v758 = vmul.f32 %v740, %v755
        %v759 = vmul.f32 %v744, %v755
        %v760 = vmul.f32 %v748, %v755
        %765 = vrot.lane.b32.xlu0 %v757, 127
        %v766 = vpop.permute.xlu0 %765
        %767 = vrot.lane.b32.xlu0 %v758, 127
        %v768 = vpop.permute.xlu0 %767
        %769 = vrot.lane.b32.xlu0 %v759, 127
        %v770 = vpop.permute.xlu0 %769
        %771 = vrot.lane.b32.xlu0 %v760, 127
        %v772 = vpop.permute.xlu0 %771
        %v773 = vsel %vm448, %v766, %v768
        %v774 = vsel %vm448, %v770, %v772
        %v777 = vadd.f32 %v706, %v773
        %v778 = vadd.f32 %v707, %v774
        %v779 = vld [vmem:[%s281 + $0x2c] sm:$0xf]
        %v780 = vunpack.c.l.bf16 %v779
        %782 = vrot.lane.b32.xlu0 %v780, 2
        %v783 = vpop.permute.xlu0 %782
        %v785 = vmul.f32 %v736, %v783
        %v786 = vmul.f32 %v740, %v783
        %v787 = vmul.f32 %v744, %v783
        %v788 = vmul.f32 %v748, %v783
        %793 = vrot.lane.b32.xlu0 %v785, 126
        %v794 = vpop.permute.xlu0 %793
        %795 = vrot.lane.b32.xlu0 %v786, 126
        %v796 = vpop.permute.xlu0 %795
        %797 = vrot.lane.b32.xlu0 %v787, 126
        %v798 = vpop.permute.xlu0 %797
        %799 = vrot.lane.b32.xlu0 %v788, 126
        %v800 = vpop.permute.xlu0 %799
        %v801 = vsel %vm477, %v794, %v796
        %v802 = vsel %vm477, %v798, %v800
        %v805 = vadd.f32 %v777, %v801
        %v806 = vadd.f32 %v778, %v802
        %v807 = vld [vmem:[%s281 + $0x30] sm:$0xf]
        %v808 = vunpack.c.l.bf16 %v807
        %810 = vrot.lane.b32.xlu0 %v808, 18
        %v811 = vpop.permute.xlu0 %810
        %v813 = vmul.f32 %v736, %v811
        %v814 = vmul.f32 %v740, %v811
        %v815 = vmul.f32 %v744, %v811
        %v816 = vmul.f32 %v748, %v811
        %821 = vrot.lane.b32.xlu0 %v813, 110
        %v822 = vpop.permute.xlu0 %821
        %823 = vrot.lane.b32.xlu0 %v814, 110
        %v824 = vpop.permute.xlu0 %823
        %825 = vrot.lane.b32.xlu0 %v815, 110
        %v826 = vpop.permute.xlu0 %825
        %827 = vrot.lane.b32.xlu0 %v816, 110
        %v828 = vpop.permute.xlu0 %827
        %v829 = vsel %vm506, %v822, %v824
        %v830 = vsel %vm506, %v826, %v828
        %v833 = vadd.f32 %v805, %v829
        %v834 = vadd.f32 %v806, %v830
        %v835 = vld [vmem:[%s281 + $0x34] sm:$0xf]
        %v836 = vunpack.c.l.bf16 %v835
        %838 = vrot.lane.b32.xlu0 %v836, 19
        %v839 = vpop.permute.xlu0 %838
        %v841 = vmul.f32 %v736, %v839
        %v842 = vmul.f32 %v740, %v839
        %v843 = vmul.f32 %v744, %v839
        %v844 = vmul.f32 %v748, %v839
        %849 = vrot.lane.b32.xlu0 %v841, 109
        %v850 = vpop.permute.xlu0 %849
        %851 = vrot.lane.b32.xlu0 %v842, 109
        %v852 = vpop.permute.xlu0 %851
        %853 = vrot.lane.b32.xlu0 %v843, 109
        %v854 = vpop.permute.xlu0 %853
        %855 = vrot.lane.b32.xlu0 %v844, 109
        %v856 = vpop.permute.xlu0 %855
        %v857 = vsel %vm535, %v850, %v852
        %v858 = vsel %vm535, %v854, %v856
        %v861 = vadd.f32 %v833, %v857
        %v862 = vadd.f32 %v834, %v858
        %v863 = vld [vmem:[%s281 + $0x38] sm:$0xf]
        %v864 = vunpack.c.l.bf16 %v863
        %866 = vrot.lane.b32.xlu0 %v864, 20
        %v867 = vpop.permute.xlu0 %866
        %v869 = vmul.f32 %v736, %v867
        %v870 = vmul.f32 %v740, %v867
        %v871 = vmul.f32 %v744, %v867
        %v872 = vmul.f32 %v748, %v867
        %877 = vrot.lane.b32.xlu0 %v869, 108
        %v878 = vpop.permute.xlu0 %877
        %879 = vrot.lane.b32.xlu0 %v870, 108
        %v880 = vpop.permute.xlu0 %879
        %881 = vrot.lane.b32.xlu0 %v871, 108
        %v882 = vpop.permute.xlu0 %881
        %883 = vrot.lane.b32.xlu0 %v872, 108
        %v884 = vpop.permute.xlu0 %883
        %v885 = vsel %vm564, %v878, %v880
        %v886 = vsel %vm564, %v882, %v884
        %v889 = vadd.f32 %v861, %v885
        %v890 = vadd.f32 %v862, %v886
        %v891 = vld [vmem:[%s281 + $0x3c] sm:$0xf]
        %v892 = vunpack.c.l.bf16 %v891
        %894 = vrot.lane.b32.xlu0 %v892, 36
        %v895 = vpop.permute.xlu0 %894
        %v897 = vmul.f32 %v736, %v895
        %v898 = vmul.f32 %v740, %v895
        %v899 = vmul.f32 %v744, %v895
        %v900 = vmul.f32 %v748, %v895
        %905 = vrot.lane.b32.xlu0 %v897, 92
        %v906 = vpop.permute.xlu0 %905
        %907 = vrot.lane.b32.xlu0 %v898, 92
        %v908 = vpop.permute.xlu0 %907
        %909 = vrot.lane.b32.xlu0 %v899, 92
        %v910 = vpop.permute.xlu0 %909
        %911 = vrot.lane.b32.xlu0 %v900, 92
        %v912 = vpop.permute.xlu0 %911
        %v913 = vsel %vm593, %v906, %v908
        %v914 = vsel %vm593, %v910, %v912
        %v917 = vadd.f32 %v889, %v913
        %v918 = vadd.f32 %v890, %v914
        %v919 = vld [vmem:[%s281 + $0x40] sm:$0xf]
        %v920 = vunpack.c.l.bf16 %v919
        %922 = vrot.lane.b32.xlu0 %v920, 37
        %v923 = vpop.permute.xlu0 %922
        %v925 = vmul.f32 %v736, %v923
        %v926 = vmul.f32 %v740, %v923
        %v927 = vmul.f32 %v744, %v923
        %v928 = vmul.f32 %v748, %v923
        %933 = vrot.lane.b32.xlu0 %v925, 91
        %v934 = vpop.permute.xlu0 %933
        %935 = vrot.lane.b32.xlu0 %v926, 91
        %v936 = vpop.permute.xlu0 %935
        %937 = vrot.lane.b32.xlu0 %v927, 91
        %v938 = vpop.permute.xlu0 %937
        %939 = vrot.lane.b32.xlu0 %v928, 91
        %v940 = vpop.permute.xlu0 %939
        %v941 = vsel %vm622, %v934, %v936
        %v942 = vsel %vm622, %v938, %v940
        %v945 = vadd.f32 %v917, %v941
        %v946 = vadd.f32 %v918, %v942
        %v947 = vld [vmem:[%s281 + $0x44] sm:$0xf]
        %v948 = vunpack.c.l.bf16 %v947
        %950 = vrot.lane.b32.xlu0 %v948, 38
        %v951 = vpop.permute.xlu0 %950
        %v953 = vmul.f32 %v736, %v951
        %v954 = vmul.f32 %v740, %v951
        %v955 = vmul.f32 %v744, %v951
        %v956 = vmul.f32 %v748, %v951
        %961 = vrot.lane.b32.xlu0 %v953, 90
        %v962 = vpop.permute.xlu0 %961
        %963 = vrot.lane.b32.xlu0 %v954, 90
        %v964 = vpop.permute.xlu0 %963
        %965 = vrot.lane.b32.xlu0 %v955, 90
        %v966 = vpop.permute.xlu0 %965
        %967 = vrot.lane.b32.xlu0 %v956, 90
        %v968 = vpop.permute.xlu0 %967
        %v969 = vsel %vm651, %v962, %v964
        %v970 = vsel %vm651, %v966, %v968
        %v973 = vadd.f32 %v945, %v969
        %v974 = vadd.f32 %v946, %v970
        %v975 = vld [vmem:[%s263 + $0x2] sm:$0x1]
        %v976 = vld [vmem:[%s263 + $0x6] sm:$0x1]
        %v977 = vld [vmem:[%s272 + $0x2] sm:$0x1]
        %v978 = vld [vmem:[%s272 + $0x6] sm:$0x1]
        %v981 = vrot.slane %v976, 7
        %v982 = vsel %vm339, %v981, %v975
        %v985 = vrot.slane %v978, 7
        %v986 = vsel %vm339, %v985, %v977
        %v987 = vld [vmem:[%s281 + $0x48] sm:$0xf]
        %v988 = vunpack.c.l.bf16 %v987
        %v990 = vunpack.c.l.s4 1966171168
        %v991 = vunpack.c.0.s8 %v990
        %v992 = vlaneseq
        %v993 = vshrl.u32 %v992, 7
        %v994 = vsub.s32 %v991, %v993
        %v995 = vrot.slane %v982, %v994
        %v996 = vcombine.high %v995, %v995
        %v998 = vunpack.c.l.s4 1966171168
        %v999 = vunpack.c.0.s8 %v998
        %v1000 = vlaneseq
        %v1001 = vshrl.u32 %v1000, 7
        %v1002 = vsub.s32 %v999, %v1001
        %v1003 = vrot.slane %v995, %v1002
        %v1005 = vunpack.c.l.s4 1966171168
        %v1006 = vunpack.c.0.s8 %v1005
        %v1007 = vlaneseq
        %v1008 = vshrl.u32 %v1007, 7
        %v1009 = vsub.s32 %v1006, %v1008
        %v1010 = vrot.slane %v996, %v1009
        %v1011 = vlaneseq
        %v1012 = vshrl.u32 %v1011, 7
        %v1013 = vsub.s32 0, %v1012
        %v1014 = vrot.slane %v1003, %v1013
        %v1015 = vlaneseq
        %v1016 = vshrl.u32 %v1015, 7
        %v1017 = vsub.s32 0, %v1016
        %v1018 = vrot.slane %v1010, %v1017
        %v1021 = vmul.f32 %v1014, %v988
        %v1022 = vmul.f32 %v1018, %v988
        %v1023 = vadd.f32 %v973, %v1021
        %v1024 = vadd.f32 %v974, %v1022
        %v1025 = vld [vmem:[%s281 + $0x4c] sm:$0xf]
        %v1026 = vunpack.c.l.bf16 %v1025
        %v1027 = vcombine.low %v982, %v986
        %v1029 = vunpack.c.l.s4 1966171168
        %v1030 = vunpack.c.0.s8 %v1029
        %v1031 = vlaneseq
        %v1032 = vshrl.u32 %v1031, 7
        %v1033 = vsub.s32 %v1030, %v1032
        %v1034 = vrot.slane %v1027, %v1033
        %v1035 = vcombine.high %v1034, %v1034
        %v1037 = vunpack.c.l.s4 1966171168
        %v1038 = vunpack.c.0.s8 %v1037
        %v1039 = vlaneseq
        %v1040 = vshrl.u32 %v1039, 7
        %v1041 = vsub.s32 %v1038, %v1040
        %v1042 = vrot.slane %v1034, %v1041
        %v1044 = vunpack.c.l.s4 1966171168
        %v1045 = vunpack.c.0.s8 %v1044
        %v1046 = vlaneseq
        %v1047 = vshrl.u32 %v1046, 7
        %v1048 = vsub.s32 %v1045, %v1047
        %v1049 = vrot.slane %v1035, %v1048
        %v1050 = vlaneseq
        %v1051 = vshrl.u32 %v1050, 7
        %v1052 = vsub.s32 0, %v1051
        %v1053 = vrot.slane %v1042, %v1052
        %v1054 = vlaneseq
        %v1055 = vshrl.u32 %v1054, 7
        %v1056 = vsub.s32 1, %v1055
        %v1057 = vrot.slane %v1042, %v1056
        %v1058 = vlaneseq
        %v1059 = vshrl.u32 %v1058, 7
        %v1060 = vsub.s32 0, %v1059
        %v1061 = vrot.slane %v1049, %v1060
        %v1062 = vlaneseq
        %v1063 = vshrl.u32 %v1062, 7
        %v1064 = vsub.s32 1, %v1063
        %v1065 = vrot.slane %v1049, %v1064
        %1071 = vrot.lane.b32.xlu0 %v1026, 1
        %v1072 = vpop.permute.xlu0 %1071
        %v1074 = vmul.f32 %v1053, %v1072
        %v1075 = vmul.f32 %v1057, %v1072
        %v1076 = vmul.f32 %v1061, %v1072
        %v1077 = vmul.f32 %v1065, %v1072
        %1082 = vrot.lane.b32.xlu0 %v1074, 127
        %v1083 = vpop.permute.xlu0 %1082
        %1084 = vrot.lane.b32.xlu0 %v1075, 127
        %v1085 = vpop.permute.xlu0 %1084
        %1086 = vrot.lane.b32.xlu0 %v1076, 127
        %v1087 = vpop.permute.xlu0 %1086
        %1088 = vrot.lane.b32.xlu0 %v1077, 127
        %v1089 = vpop.permute.xlu0 %1088
        %v1090 = vsel %vm448, %v1083, %v1085
        %v1091 = vsel %vm448, %v1087, %v1089
        %v1094 = vadd.f32 %v1023, %v1090
        %v1095 = vadd.f32 %v1024, %v1091
        %v1096 = vld [vmem:[%s281 + $0x50] sm:$0xf]
        %v1097 = vunpack.c.l.bf16 %v1096
        %1099 = vrot.lane.b32.xlu0 %v1097, 2
        %v1100 = vpop.permute.xlu0 %1099
        %v1102 = vmul.f32 %v1053, %v1100
        %v1103 = vmul.f32 %v1057, %v1100
        %v1104 = vmul.f32 %v1061, %v1100
        %v1105 = vmul.f32 %v1065, %v1100
        %1110 = vrot.lane.b32.xlu0 %v1102, 126
        %v1111 = vpop.permute.xlu0 %1110
        %1112 = vrot.lane.b32.xlu0 %v1103, 126
        %v1113 = vpop.permute.xlu0 %1112
        %1114 = vrot.lane.b32.xlu0 %v1104, 126
        %v1115 = vpop.permute.xlu0 %1114
        %1116 = vrot.lane.b32.xlu0 %v1105, 126
        %v1117 = vpop.permute.xlu0 %1116
        %v1118 = vsel %vm477, %v1111, %v1113
        %v1119 = vsel %vm477, %v1115, %v1117
        %v1122 = vadd.f32 %v1094, %v1118
        %v1123 = vadd.f32 %v1095, %v1119
        %v1124 = vld [vmem:[%s281 + $0x54] sm:$0xf]
        %v1125 = vunpack.c.l.bf16 %v1124
        %1127 = vrot.lane.b32.xlu0 %v1125, 18
        %v1128 = vpop.permute.xlu0 %1127
        %v1130 = vmul.f32 %v1053, %v1128
        %v1131 = vmul.f32 %v1057, %v1128
        %v1132 = vmul.f32 %v1061, %v1128
        %v1133 = vmul.f32 %v1065, %v1128
        %1138 = vrot.lane.b32.xlu0 %v1130, 110
        %v1139 = vpop.permute.xlu0 %1138
        %1140 = vrot.lane.b32.xlu0 %v1131, 110
        %v1141 = vpop.permute.xlu0 %1140
        %1142 = vrot.lane.b32.xlu0 %v1132, 110
        %v1143 = vpop.permute.xlu0 %1142
        %1144 = vrot.lane.b32.xlu0 %v1133, 110
        %v1145 = vpop.permute.xlu0 %1144
        %v1146 = vsel %vm506, %v1139, %v1141
        %v1147 = vsel %vm506, %v1143, %v1145
        %v1150 = vadd.f32 %v1122, %v1146
        %v1151 = vadd.f32 %v1123, %v1147
        %v1152 = vld [vmem:[%s281 + $0x58] sm:$0xf]
        %v1153 = vunpack.c.l.bf16 %v1152
        %1155 = vrot.lane.b32.xlu0 %v1153, 19
        %v1156 = vpop.permute.xlu0 %1155
        %v1158 = vmul.f32 %v1053, %v1156
        %v1159 = vmul.f32 %v1057, %v1156
        %v1160 = vmul.f32 %v1061, %v1156
        %v1161 = vmul.f32 %v1065, %v1156
        %1166 = vrot.lane.b32.xlu0 %v1158, 109
        %v1167 = vpop.permute.xlu0 %1166
        %1168 = vrot.lane.b32.xlu0 %v1159, 109
        %v1169 = vpop.permute.xlu0 %1168
        %1170 = vrot.lane.b32.xlu0 %v1160, 109
        %v1171 = vpop.permute.xlu0 %1170
        %1172 = vrot.lane.b32.xlu0 %v1161, 109
        %v1173 = vpop.permute.xlu0 %1172
        %v1174 = vsel %vm535, %v1167, %v1169
        %v1175 = vsel %vm535, %v1171, %v1173
        %v1178 = vadd.f32 %v1150, %v1174
        %v1179 = vadd.f32 %v1151, %v1175
        %v1180 = vld [vmem:[%s281 + $0x5c] sm:$0xf]
        %v1181 = vunpack.c.l.bf16 %v1180
        %1183 = vrot.lane.b32.xlu0 %v1181, 20
        %v1184 = vpop.permute.xlu0 %1183
        %v1186 = vmul.f32 %v1053, %v1184
        %v1187 = vmul.f32 %v1057, %v1184
        %v1188 = vmul.f32 %v1061, %v1184
        %v1189 = vmul.f32 %v1065, %v1184
        %1194 = vrot.lane.b32.xlu0 %v1186, 108
        %v1195 = vpop.permute.xlu0 %1194
        %1196 = vrot.lane.b32.xlu0 %v1187, 108
        %v1197 = vpop.permute.xlu0 %1196
        %1198 = vrot.lane.b32.xlu0 %v1188, 108
        %v1199 = vpop.permute.xlu0 %1198
        %1200 = vrot.lane.b32.xlu0 %v1189, 108
        %v1201 = vpop.permute.xlu0 %1200
        %v1202 = vsel %vm564, %v1195, %v1197
        %v1203 = vsel %vm564, %v1199, %v1201
        %v1206 = vadd.f32 %v1178, %v1202
        %v1207 = vadd.f32 %v1179, %v1203
        %v1208 = vld [vmem:[%s281 + $0x60] sm:$0xf]
        %v1209 = vunpack.c.l.bf16 %v1208
        %1211 = vrot.lane.b32.xlu0 %v1209, 36
        %v1212 = vpop.permute.xlu0 %1211
        %v1214 = vmul.f32 %v1053, %v1212
        %v1215 = vmul.f32 %v1057, %v1212
        %v1216 = vmul.f32 %v1061, %v1212
        %v1217 = vmul.f32 %v1065, %v1212
        %1222 = vrot.lane.b32.xlu0 %v1214, 92
        %v1223 = vpop.permute.xlu0 %1222
        %1224 = vrot.lane.b32.xlu0 %v1215, 92
        %v1225 = vpop.permute.xlu0 %1224
        %1226 = vrot.lane.b32.xlu0 %v1216, 92
        %v1227 = vpop.permute.xlu0 %1226
        %1228 = vrot.lane.b32.xlu0 %v1217, 92
        %v1229 = vpop.permute.xlu0 %1228
        %v1230 = vsel %vm593, %v1223, %v1225
        %v1231 = vsel %vm593, %v1227, %v1229
        %v1234 = vadd.f32 %v1206, %v1230
        %v1235 = vadd.f32 %v1207, %v1231
        %v1236 = vld [vmem:[%s281 + $0x64] sm:$0xf]
        %v1237 = vunpack.c.l.bf16 %v1236
        %1239 = vrot.lane.b32.xlu0 %v1237, 37
        %v1240 = vpop.permute.xlu0 %1239
        %v1242 = vmul.f32 %v1053, %v1240
        %v1243 = vmul.f32 %v1057, %v1240
        %v1244 = vmul.f32 %v1061, %v1240
        %v1245 = vmul.f32 %v1065, %v1240
        %1250 = vrot.lane.b32.xlu0 %v1242, 91
        %v1251 = vpop.permute.xlu0 %1250
        %1252 = vrot.lane.b32.xlu0 %v1243, 91
        %v1253 = vpop.permute.xlu0 %1252
        %1254 = vrot.lane.b32.xlu0 %v1244, 91
        %v1255 = vpop.permute.xlu0 %1254
        %1256 = vrot.lane.b32.xlu0 %v1245, 91
        %v1257 = vpop.permute.xlu0 %1256
        %v1258 = vsel %vm622, %v1251, %v1253
        %v1259 = vsel %vm622, %v1255, %v1257
        %v1262 = vadd.f32 %v1234, %v1258
        %v1263 = vadd.f32 %v1235, %v1259
        %v1264 = vld [vmem:[%s281 + $0x68] sm:$0xf]
        %v1265 = vunpack.c.l.bf16 %v1264
        %1267 = vrot.lane.b32.xlu0 %v1265, 38
        %v1268 = vpop.permute.xlu0 %1267
        %v1270 = vmul.f32 %v1053, %v1268
        %v1271 = vmul.f32 %v1057, %v1268
        %v1272 = vmul.f32 %v1061, %v1268
        %v1273 = vmul.f32 %v1065, %v1268
        %1278 = vrot.lane.b32.xlu0 %v1270, 90
        %v1279 = vpop.permute.xlu0 %1278
        %1280 = vrot.lane.b32.xlu0 %v1271, 90
        %v1281 = vpop.permute.xlu0 %1280
        %1282 = vrot.lane.b32.xlu0 %v1272, 90
        %v1283 = vpop.permute.xlu0 %1282
        %1284 = vrot.lane.b32.xlu0 %v1273, 90
        %v1285 = vpop.permute.xlu0 %1284
        %v1286 = vsel %vm651, %v1279, %v1281
        %v1287 = vsel %vm651, %v1283, %v1285
        %v1290 = vadd.f32 %v1262, %v1286
        %v1291 = vadd.f32 %v1263, %v1287
        %v1292 = vld [vmem:[%s263 + $0x3] sm:$0x1]
        %v1293 = vld [vmem:[%s263 + $0x7] sm:$0x1]
        %v1294 = vld [vmem:[%s272 + $0x3] sm:$0x1]
        %v1295 = vld [vmem:[%s272 + $0x7] sm:$0x1]
        %v1298 = vrot.slane %v1293, 7
        %v1299 = vsel %vm339, %v1298, %v1292
        %v1302 = vrot.slane %v1295, 7
        %v1303 = vsel %vm339, %v1302, %v1294
        %v1304 = vld [vmem:[%s281 + $0x6c] sm:$0xf]
        %v1305 = vunpack.c.l.bf16 %v1304
        %v1307 = vunpack.c.l.s4 1966171168
        %v1308 = vunpack.c.0.s8 %v1307
        %v1309 = vlaneseq
        %v1310 = vshrl.u32 %v1309, 7
        %v1311 = vsub.s32 %v1308, %v1310
        %v1312 = vrot.slane %v1299, %v1311
        %v1313 = vcombine.high %v1312, %v1312
        %v1315 = vunpack.c.l.s4 1966171168
        %v1316 = vunpack.c.0.s8 %v1315
        %v1317 = vlaneseq
        %v1318 = vshrl.u32 %v1317, 7
        %v1319 = vsub.s32 %v1316, %v1318
        %v1320 = vrot.slane %v1312, %v1319
        %v1322 = vunpack.c.l.s4 1966171168
        %v1323 = vunpack.c.0.s8 %v1322
        %v1324 = vlaneseq
        %v1325 = vshrl.u32 %v1324, 7
        %v1326 = vsub.s32 %v1323, %v1325
        %v1327 = vrot.slane %v1313, %v1326
        %v1328 = vlaneseq
        %v1329 = vshrl.u32 %v1328, 7
        %v1330 = vsub.s32 0, %v1329
        %v1331 = vrot.slane %v1320, %v1330
        %v1332 = vlaneseq
        %v1333 = vshrl.u32 %v1332, 7
        %v1334 = vsub.s32 0, %v1333
        %v1335 = vrot.slane %v1327, %v1334
        %v1338 = vmul.f32 %v1331, %v1305
        %v1339 = vmul.f32 %v1335, %v1305
        %v1340 = vadd.f32 %v1290, %v1338
        %v1341 = vadd.f32 %v1291, %v1339
        %v1342 = vld [vmem:[%s281 + $0x70] sm:$0xf]
        %v1343 = vunpack.c.l.bf16 %v1342
        %v1344 = vcombine.low %v1299, %v1303
        %v1346 = vunpack.c.l.s4 1966171168
        %v1347 = vunpack.c.0.s8 %v1346
        %v1348 = vlaneseq
        %v1349 = vshrl.u32 %v1348, 7
        %v1350 = vsub.s32 %v1347, %v1349
        %v1351 = vrot.slane %v1344, %v1350
        %v1352 = vcombine.high %v1351, %v1351
        %v1354 = vunpack.c.l.s4 1966171168
        %v1355 = vunpack.c.0.s8 %v1354
        %v1356 = vlaneseq
        %v1357 = vshrl.u32 %v1356, 7
        %v1358 = vsub.s32 %v1355, %v1357
        %v1359 = vrot.slane %v1351, %v1358
        %v1361 = vunpack.c.l.s4 1966171168
        %v1362 = vunpack.c.0.s8 %v1361
        %v1363 = vlaneseq
        %v1364 = vshrl.u32 %v1363, 7
        %v1365 = vsub.s32 %v1362, %v1364
        %v1366 = vrot.slane %v1352, %v1365
        %v1367 = vlaneseq
        %v1368 = vshrl.u32 %v1367, 7
        %v1369 = vsub.s32 0, %v1368
        %v1370 = vrot.slane %v1359, %v1369
        %v1371 = vlaneseq
        %v1372 = vshrl.u32 %v1371, 7
        %v1373 = vsub.s32 1, %v1372
        %v1374 = vrot.slane %v1359, %v1373
        %v1375 = vlaneseq
        %v1376 = vshrl.u32 %v1375, 7
        %v1377 = vsub.s32 0, %v1376
        %v1378 = vrot.slane %v1366, %v1377
        %v1379 = vlaneseq
        %v1380 = vshrl.u32 %v1379, 7
        %v1381 = vsub.s32 1, %v1380
        %v1382 = vrot.slane %v1366, %v1381
        %1388 = vrot.lane.b32.xlu0 %v1343, 1
        %v1389 = vpop.permute.xlu0 %1388
        %v1391 = vmul.f32 %v1370, %v1389
        %v1392 = vmul.f32 %v1374, %v1389
        %v1393 = vmul.f32 %v1378, %v1389
        %v1394 = vmul.f32 %v1382, %v1389
        %1399 = vrot.lane.b32.xlu0 %v1391, 127
        %v1400 = vpop.permute.xlu0 %1399
        %1401 = vrot.lane.b32.xlu0 %v1392, 127
        %v1402 = vpop.permute.xlu0 %1401
        %1403 = vrot.lane.b32.xlu0 %v1393, 127
        %v1404 = vpop.permute.xlu0 %1403
        %1405 = vrot.lane.b32.xlu0 %v1394, 127
        %v1406 = vpop.permute.xlu0 %1405
        %v1407 = vsel %vm448, %v1400, %v1402
        %v1408 = vsel %vm448, %v1404, %v1406
        %v1411 = vadd.f32 %v1340, %v1407
        %v1412 = vadd.f32 %v1341, %v1408
        %v1413 = vld [vmem:[%s281 + $0x74] sm:$0xf]
        %v1414 = vunpack.c.l.bf16 %v1413
        %1416 = vrot.lane.b32.xlu0 %v1414, 2
        %v1417 = vpop.permute.xlu0 %1416
        %v1419 = vmul.f32 %v1370, %v1417
        %v1420 = vmul.f32 %v1374, %v1417
        %v1421 = vmul.f32 %v1378, %v1417
        %v1422 = vmul.f32 %v1382, %v1417
        %1427 = vrot.lane.b32.xlu0 %v1419, 126
        %v1428 = vpop.permute.xlu0 %1427
        %1429 = vrot.lane.b32.xlu0 %v1420, 126
        %v1430 = vpop.permute.xlu0 %1429
        %1431 = vrot.lane.b32.xlu0 %v1421, 126
        %v1432 = vpop.permute.xlu0 %1431
        %1433 = vrot.lane.b32.xlu0 %v1422, 126
        %v1434 = vpop.permute.xlu0 %1433
        %v1435 = vsel %vm477, %v1428, %v1430
        %v1436 = vsel %vm477, %v1432, %v1434
        %v1439 = vadd.f32 %v1411, %v1435
        %v1440 = vadd.f32 %v1412, %v1436
        %v1441 = vld [vmem:[%s281 + $0x78] sm:$0xf]
        %v1442 = vunpack.c.l.bf16 %v1441
        %1444 = vrot.lane.b32.xlu0 %v1442, 18
        %v1445 = vpop.permute.xlu0 %1444
        %v1447 = vmul.f32 %v1370, %v1445
        %v1448 = vmul.f32 %v1374, %v1445
        %v1449 = vmul.f32 %v1378, %v1445
        %v1450 = vmul.f32 %v1382, %v1445
        %1455 = vrot.lane.b32.xlu0 %v1447, 110
        %v1456 = vpop.permute.xlu0 %1455
        %1457 = vrot.lane.b32.xlu0 %v1448, 110
        %v1458 = vpop.permute.xlu0 %1457
        %1459 = vrot.lane.b32.xlu0 %v1449, 110
        %v1460 = vpop.permute.xlu0 %1459
        %1461 = vrot.lane.b32.xlu0 %v1450, 110
        %v1462 = vpop.permute.xlu0 %1461
        %v1463 = vsel %vm506, %v1456, %v1458
        %v1464 = vsel %vm506, %v1460, %v1462
        %v1467 = vadd.f32 %v1439, %v1463
        %v1468 = vadd.f32 %v1440, %v1464
        %v1469 = vld [vmem:[%s281 + $0x7c] sm:$0xf]
        %v1470 = vunpack.c.l.bf16 %v1469
        %1472 = vrot.lane.b32.xlu0 %v1470, 19
        %v1473 = vpop.permute.xlu0 %1472
        %v1475 = vmul.f32 %v1370, %v1473
        %v1476 = vmul.f32 %v1374, %v1473
        %v1477 = vmul.f32 %v1378, %v1473
        %v1478 = vmul.f32 %v1382, %v1473
        %1483 = vrot.lane.b32.xlu0 %v1475, 109
        %v1484 = vpop.permute.xlu0 %1483
        %1485 = vrot.lane.b32.xlu0 %v1476, 109
        %v1486 = vpop.permute.xlu0 %1485
        %1487 = vrot.lane.b32.xlu0 %v1477, 109
        %v1488 = vpop.permute.xlu0 %1487
        %1489 = vrot.lane.b32.xlu0 %v1478, 109
        %v1490 = vpop.permute.xlu0 %1489
        %v1491 = vsel %vm535, %v1484, %v1486
        %v1492 = vsel %vm535, %v1488, %v1490
        %v1495 = vadd.f32 %v1467, %v1491
        %v1496 = vadd.f32 %v1468, %v1492
        %v1497 = vld [vmem:[%s281 + $0x80] sm:$0xf]
        %v1498 = vunpack.c.l.bf16 %v1497
        %1500 = vrot.lane.b32.xlu0 %v1498, 20
        %v1501 = vpop.permute.xlu0 %1500
        %v1503 = vmul.f32 %v1370, %v1501
        %v1504 = vmul.f32 %v1374, %v1501
        %v1505 = vmul.f32 %v1378, %v1501
        %v1506 = vmul.f32 %v1382, %v1501
        %1511 = vrot.lane.b32.xlu0 %v1503, 108
        %v1512 = vpop.permute.xlu0 %1511
        %1513 = vrot.lane.b32.xlu0 %v1504, 108
        %v1514 = vpop.permute.xlu0 %1513
        %1515 = vrot.lane.b32.xlu0 %v1505, 108
        %v1516 = vpop.permute.xlu0 %1515
        %1517 = vrot.lane.b32.xlu0 %v1506, 108
        %v1518 = vpop.permute.xlu0 %1517
        %v1519 = vsel %vm564, %v1512, %v1514
        %v1520 = vsel %vm564, %v1516, %v1518
        %v1523 = vadd.f32 %v1495, %v1519
        %v1524 = vadd.f32 %v1496, %v1520
        %v1525 = vld [vmem:[%s281 + $0x84] sm:$0xf]
        %v1526 = vunpack.c.l.bf16 %v1525
        %1528 = vrot.lane.b32.xlu0 %v1526, 36
        %v1529 = vpop.permute.xlu0 %1528
        %v1531 = vmul.f32 %v1370, %v1529
        %v1532 = vmul.f32 %v1374, %v1529
        %v1533 = vmul.f32 %v1378, %v1529
        %v1534 = vmul.f32 %v1382, %v1529
        %1539 = vrot.lane.b32.xlu0 %v1531, 92
        %v1540 = vpop.permute.xlu0 %1539
        %1541 = vrot.lane.b32.xlu0 %v1532, 92
        %v1542 = vpop.permute.xlu0 %1541
        %1543 = vrot.lane.b32.xlu0 %v1533, 92
        %v1544 = vpop.permute.xlu0 %1543
        %1545 = vrot.lane.b32.xlu0 %v1534, 92
        %v1546 = vpop.permute.xlu0 %1545
        %v1547 = vsel %vm593, %v1540, %v1542
        %v1548 = vsel %vm593, %v1544, %v1546
        %v1551 = vadd.f32 %v1523, %v1547
        %v1552 = vadd.f32 %v1524, %v1548
        %v1553 = vld [vmem:[%s281 + $0x88] sm:$0xf]
        %v1554 = vunpack.c.l.bf16 %v1553
        %1556 = vrot.lane.b32.xlu0 %v1554, 37
        %v1557 = vpop.permute.xlu0 %1556
        %v1559 = vmul.f32 %v1370, %v1557
        %v1560 = vmul.f32 %v1374, %v1557
        %v1561 = vmul.f32 %v1378, %v1557
        %v1562 = vmul.f32 %v1382, %v1557
        %1567 = vrot.lane.b32.xlu0 %v1559, 91
        %v1568 = vpop.permute.xlu0 %1567
        %1569 = vrot.lane.b32.xlu0 %v1560, 91
        %v1570 = vpop.permute.xlu0 %1569
        %1571 = vrot.lane.b32.xlu0 %v1561, 91
        %v1572 = vpop.permute.xlu0 %1571
        %1573 = vrot.lane.b32.xlu0 %v1562, 91
        %v1574 = vpop.permute.xlu0 %1573
        %v1575 = vsel %vm622, %v1568, %v1570
        %v1576 = vsel %vm622, %v1572, %v1574
        %v1579 = vadd.f32 %v1551, %v1575
        %v1580 = vadd.f32 %v1552, %v1576
        %v1581 = vld [vmem:[%s281 + $0x8c] sm:$0xf]
        %v1582 = vunpack.c.l.bf16 %v1581
        %1584 = vrot.lane.b32.xlu0 %v1582, 38
        %v1585 = vpop.permute.xlu0 %1584
        %v1587 = vmul.f32 %v1370, %v1585
        %v1588 = vmul.f32 %v1374, %v1585
        %v1589 = vmul.f32 %v1378, %v1585
        %v1590 = vmul.f32 %v1382, %v1585
        %1595 = vrot.lane.b32.xlu0 %v1587, 90
        %v1596 = vpop.permute.xlu0 %1595
        %1597 = vrot.lane.b32.xlu0 %v1588, 90
        %v1598 = vpop.permute.xlu0 %1597
        %1599 = vrot.lane.b32.xlu0 %v1589, 90
        %v1600 = vpop.permute.xlu0 %1599
        %1601 = vrot.lane.b32.xlu0 %v1590, 90
        %v1602 = vpop.permute.xlu0 %1601
        %v1603 = vsel %vm651, %v1596, %v1598
        %v1604 = vsel %vm651, %v1600, %v1602
        %v1607 = vadd.f32 %v1579, %v1603
        %v1608 = vadd.f32 %v1580, %v1604
        %1609 = vst [vmem:[%s329] sm:$0xff] %v1607
        %1610 = vst [vmem:[%s329 + $0x8] sm:$0xff] %v1608
        %s1611 = sand.u32 %s141, 1
        %s1612 = scalar_lea.sflag [#allocation4], %s1611
        %s1613 = sand.u32 %s141, 1
        %s1614 = smul.addr %s1613, 16
        %s1615 = scalar_lea.vmem [#allocation10], %s1614
        // Predicated region
        $region53: #{tpu_custom_call.1} parent=35 // pred_check
          %p1616 = pneg %p151
        $region54: #{tpu_custom_call.1} parent=35 // pred_check_branch
          %1618 = sbr.rel (%p1616) target = $region56
        $region55: #{tpu_custom_call.1} parent=35 // pred_region
          %s1620 = ssub.s32 256, 256
          %1621 = vsyncadd %s1612, %s1620
          %s1622 = smul.addr %s27, 128
          %s1623 = scalar_lea.hbm %s4, %s1622
          %s1624 = sshll.u32 %s1615, 4
          %s1625 = int_to_ptr.vmem [resolvable:$true] %s1624
          %1630 = dma.vmem_to_hbm [thread:$0]  %s1625, 256, %s1623, %s1612, 128, 384, 8
        $region56: #{tpu_custom_call.1} parent=35 // pred_fallthru
          _
      $region36: #{tpu_custom_call.1} parent=5 // pred_fallthru
        _
      %p1631 = scmp.le.s32.totalorder 2, %s22
      // Predicated region
      $region57: #{tpu_custom_call.1} parent=5 // pred_check
        %p1632 = pneg %p1631
      $region58: #{tpu_custom_call.1} parent=5 // pred_check_branch
        %1634 = sbr.rel (%p1632) target = $region60
      $region59: #{tpu_custom_call.1} parent=5 // pred_region
        %s1635 = ssub.s32 %s22, 2
        // Predicated region
        $region61: #{tpu_custom_call.1} parent=59 // pred_check
          %p1636 = pneg %p157
        $region62: #{tpu_custom_call.1} parent=59 // pred_check_branch
          %1638 = sbr.rel (%p1636) target = $region64
        $region63: #{tpu_custom_call.1} parent=59 // pred_region
          %s1639 = sand.u32 %s142, 1
          %s1640 = scalar_lea.sflag [#allocation4], %s1639
          %s1641 = sand.u32 %s142, 1
          %s1642 = smul.addr %s1641, 16
          %s1643 = scalar_lea.vmem [#allocation10], %s1642
          %1644 = dma.done %s1640, 256
        $region64: #{tpu_custom_call.1} parent=59 // pred_fallthru
          _
      $region60: #{tpu_custom_call.1} parent=5 // pred_fallthru
        _
    $region6: #{tpu_custom_call.1} parent=1 // loop_footer
      %s26 = sadd.s32 1, %s22
    $region7: #{tpu_custom_call.1} parent=1 // loop_footer_branch
      %21 = sbr.rel target = $region3
    $region8: #{tpu_custom_call.1} parent=1 // loop_exit
      _
    %1645 = vsyncpa [#allocation3], 1
    %s1646 = scalar_lea.sflag [#allocation3], 1
    %1647 = vsyncpa %s1646, 1
    %1648 = vsyncpa [#allocation6], 1
    %s1649 = scalar_lea.sflag [#allocation6], 1
    %1650 = vsyncpa %s1649, 1
    %1651 = vsyncpa [#allocation9], 1
    %s1652 = scalar_lea.sflag [#allocation9], 1
    %1653 = vsyncpa %s1652, 1
    %1654 = vsyncpa [#allocation4], 1
    %s1655 = scalar_lea.sflag [#allocation4], 1
    %1656 = vsyncpa %s1655, 1

</llo_original>
